<compile_context>
chip_gen: v5e
topology: v5e:2x2
jax: 0.10.0
libtpu: 0.0.40
codegen_flags: <defaults>
</compile_context>

<pallas_src>
import jax
import jax.numpy as jnp
import numpy as np
from jax import lax
from jax.experimental import pallas as pl
from jax.experimental.pallas import tpu as pltpu

SELU_SCALE = 1.0507009873554805
SELU_ALPHA = 1.6732632423543772


# --------------------------------------------------------------------------- #
# Kernel 1: per-token masked-max word pooling fused with the (folded,
#           concatenated) enc-side projections
#           (get_word_representation + aspect_fc/opinion_fc @ Wp[D:])
# --------------------------------------------------------------------------- #
def word_rep_proj_kernel(minv_ref, widx_ref, states_ref, we_ref, be_ref,
                         out_ref, wrep_ref):
    c = pl.program_id(1)
    minv = minv_ref[0, 0]

    @pl.when(c == 0)
    def _():
        wrep_ref[...] = jnp.full(wrep_ref.shape, minv, dtype=jnp.float32)

    sc = widx_ref.shape[1]

    def body(t, carry):
        # One token at a time: live vector state is a single (Lw, D) tile.
        m = widx_ref[0, pl.ds(t, 1), :]            # (1, Lw) int32
        st = states_ref[0, pl.ds(t, 1), :, :]      # (1, 1, D) f32
        cand = jnp.where(m[:, :, None] != 0, st, minv)        # (1, Lw, D)
        wrep_ref[...] = jnp.maximum(wrep_ref[...], cand)
        return carry

    lax.fori_loop(0, sc, body, 0, unroll=True)

    @pl.when(c == pl.num_programs(1) - 1)
    def _():
        D = out_ref.shape[3]
        wrep = wrep_ref[0].astype(jnp.bfloat16)    # bf16 MXU operands, f32 acc
        proj = (jnp.dot(wrep, we_ref[...], preferred_element_type=jnp.float32)
                + be_ref[...])                     # (Lw, 2D) f32, one MXU dot
        out_ref[0, 0] = proj[:, :D]                # aspect branch
        out_ref[1, 0] = proj[:, D:]                # opinion branch


def word_rep_enc_proj(min_val, word_index, enc_hidden, we, be, token_chunk=64):
    B, S, D = enc_hidden.shape
    Lw = word_index.shape[1]

    # Chunk size: multiple of 8 (sublane rule), never larger than the padded S.
    sc = min(token_chunk, ((S + 7) // 8) * 8)
    sc = ((sc + 7) // 8) * 8
    s_pad = ((S + sc - 1) // sc) * sc
    nc = s_pad // sc

    # Layout plumbing (plain XLA, cheap): tokens on the sublane axis, a unit dim
    # on the states so the kernel never needs an in-kernel middle expand, and
    # zero-padding of the token axis (padded tokens have word_index == 0, so
    # they are never selected by the masked max).
    widx_t = jnp.swapaxes(word_index, 1, 2)                    # (B, S, Lw)
    if s_pad != S:
        widx_t = jnp.pad(widx_t, ((0, 0), (0, s_pad - S), (0, 0)))
        enc_hidden = jnp.pad(enc_hidden, ((0, 0), (0, s_pad - S), (0, 0)))
    enc4 = enc_hidden.reshape(B, s_pad, 1, D)                  # (B, S_pad, 1, D)

    return pl.pallas_call(
        word_rep_proj_kernel,
        grid=(B, nc),
        in_specs=[
            pl.BlockSpec(memory_space=pltpu.MemorySpace.SMEM),        # min_val (1,1)
            pl.BlockSpec((1, sc, Lw), lambda b, c: (b, c, 0)),        # word_index^T
            pl.BlockSpec((1, sc, 1, D), lambda b, c: (b, c, 0, 0)),   # enc states
            pl.BlockSpec((D, 2 * D), lambda b, c: (0, 0)),            # [Wa|Wo]@Wpe bf16
            pl.BlockSpec((1, 2 * D), lambda b, c: (0, 0)),            # [ba|bo]@Wpe
        ],
        out_specs=pl.BlockSpec((2, 1, Lw, D), lambda b, c: (0, b, 0, 0)),
        out_shape=jax.ShapeDtypeStruct((2, B, Lw, D), jnp.float32),
        scratch_shapes=[pltpu.VMEM((1, Lw, D), jnp.float32)],
        compiler_params=pltpu.CompilerParams(
            dimension_semantics=("parallel", "arbitrary"),
            vmem_limit_bytes=32 * 1024 * 1024),
    )(min_val, widx_t, enc4, we, be)


# --------------------------------------------------------------------------- #
# Kernel 2: calculate_sim_loss for all M markers of one (sample, branch) step
#           (add marker/enc projections -> SELU -> classifier -> masked CE)
# --------------------------------------------------------------------------- #
def sim_loss_kernel(encp_ref, mkp_ref, lbl_ref, mask_ref, bp_ref, wc_ref, bc_ref,
                    lsum_ref):
    enc = encp_ref[0, 0]       # (Lw, D)    f32: word reps already through Wp[D:]
    mk = mkp_ref[0, 0]         # (M, 1, D)  f32: markers already through Wp[:D]
    lbl = lbl_ref[0, 0]        # (M, Lw)    int32 labels
    mask = mask_ref[0]         # (1, Lw)    f32: per-sample word mask (prefix zeroed)

    M = mk.shape[0]
    Lw, D = enc.shape
    C = wc_ref.shape[1]

    encb = enc + bp_ref[...]                                   # hoisted bias add
    pre = mk + encb[None, :, :]                                # (M, Lw, D)
    # SELU (expm1 only on the clamped negative part — no exp overflow).
    neg = SELU_ALPHA * jnp.expm1(jnp.minimum(pre, 0.0))
    h = SELU_SCALE * jnp.where(pre > 0.0, pre, neg)

    h2 = h.reshape(M * Lw, D).astype(jnp.bfloat16)
    logits = (jnp.dot(h2, wc_ref[...], preferred_element_type=jnp.float32)
              + bc_ref[...]).reshape(M, Lw, C)                 # (M, Lw, 3) f32

    # cross_entropy(reduction='none'), f32 math, no one-hot input.
    mx = jnp.max(logits, axis=-1, keepdims=True)
    lse = mx + jnp.log(jnp.sum(jnp.exp(logits - mx), axis=-1, keepdims=True))
    lbl3 = lbl[:, :, None]                                     # (M, Lw, 1)
    lg0 = logits[:, :, 0:1]
    lg1 = logits[:, :, 1:2]
    lg2 = logits[:, :, 2:3]
    picked = jnp.where(lbl3 == 0, lg0, jnp.where(lbl3 == 1, lg1, lg2))
    ce = lse - picked                                          # (M, Lw, 1)

    lsum_ref[...] = jnp.broadcast_to(jnp.sum(ce * mask[:, :, None]),
                                     lsum_ref.shape)


def sim_loss_partials(enc_proj, marker_proj, labels, mask3, bp, wc, bc):
    T, B, Lw, D = enc_proj.shape
    M = marker_proj.shape[2]
    C = wc.shape[1]
    return pl.pallas_call(
        sim_loss_kernel,
        grid=(B, T),
        in_specs=[
            pl.BlockSpec((1, 1, Lw, D), lambda b, t: (t, b, 0, 0)),       # enc proj
            pl.BlockSpec((1, 1, M, 1, D), lambda b, t: (t, b, 0, 0, 0)),  # marker proj
            pl.BlockSpec((1, 1, M, Lw), lambda b, t: (t, b, 0, 0)),       # int labels
            pl.BlockSpec((1, 1, Lw), lambda b, t: (b, 0, 0)),             # mask (lane-dense)
            pl.BlockSpec((1, D), lambda b, t: (0, 0)),                    # bproj
            pl.BlockSpec((D, C), lambda b, t: (0, 0)),                    # Wcls (bf16)
            pl.BlockSpec((1, C), lambda b, t: (0, 0)),                    # bcls
        ],
        out_specs=pl.BlockSpec((1, 1, 1, 1), lambda b, t: (b, t, 0, 0)),
        out_shape=jax.ShapeDtypeStruct((B, T, 1, 1), jnp.float32),
        compiler_params=pltpu.CompilerParams(
            dimension_semantics=("parallel", "parallel"),
            vmem_limit_bytes=32 * 1024 * 1024),
    )(enc_proj, marker_proj, labels, mask3, bp, wc, bc)


# --------------------------------------------------------------------------- #
# MarkerT5 forward (glue in plain JAX)
# --------------------------------------------------------------------------- #
def marker_t5_forward(params, enc_hidden, dec_hidden, word_index, word_mask,
                      aspect_pos, opinion_pos, aspect_label, opinion_label,
                      prefix_len):
    B, S, D = enc_hidden.shape
    Lw = word_index.shape[1]
    M = aspect_pos.shape[1]  # markers per sample (equal counts -> dense gather)

    # TODO(synk): outputs.loss of the underlying T5 LM is not reimplemented.
    t5_loss = jnp.float32(0.0)

    # Fold aspect_fc / opinion_fc into the encoder half of `proj`, concatenated
    # so kernel 1 does a single MXU dot:
    #   (word_reps @ Wa + ba) @ Wp[D:] == word_reps @ (Wa @ Wp[D:]) + ba @ Wp[D:]
    wpm = params["wp"][:D]                       # marker half of proj
    wpe = params["wp"][D:]                       # encoder half of proj
    we = jnp.concatenate([params["wa"] @ wpe, params["wo"] @ wpe],
                         axis=1).astype(jnp.bfloat16)           # (D, 2D)
    be = jnp.concatenate([params["ba"] @ wpe, params["bo"] @ wpe], axis=1)  # (1, 2D)

    min_val = jnp.min(enc_hidden).reshape(1, 1).astype(jnp.float32)

    # Pallas kernel 1: per-token masked-max pooling + fused enc-side projections.
    enc_proj = word_rep_enc_proj(min_val, word_index, enc_hidden, we, be)  # (2,B,Lw,D)

    # get_marker_state + marker-side projection as one batched matmul (glue).
    bi = jnp.arange(B)[:, None]
    markers = jnp.stack([dec_hidden[bi, aspect_pos],
                         dec_hidden[bi, opinion_pos]], axis=0)  # (2, B, M, D)
    marker_proj = jnp.einsum('tbmd,de->tbme', markers, wpm)[:, :, :, None, :]

    # int32 labels (no f32 one-hot in HBM), lane-dense mask.
    labels = jnp.stack([aspect_label, opinion_label], axis=0).astype(jnp.int32)
    keep = (jnp.arange(Lw)[None, :] >= prefix_len).astype(jnp.float32)
    mask = word_mask.astype(jnp.float32) * keep                 # (B, Lw)
    mask3 = mask[:, None, :]                                    # (B, 1, Lw)

    # Pallas kernel 2: per-(sample, branch) partial CE numerators, branches fused.
    lsum = sim_loss_partials(enc_proj, marker_proj, labels, mask3,
                             params["bp"], params["wc"].astype(jnp.bfloat16),
                             params["bc"])                      # (B, T, 1, 1)

    ls = jnp.sum(lsum, axis=(0, 2, 3))           # (2,) per-branch numerators
    denom = M * jnp.sum(mask)                    # scalar denominator (same per branch)
    branch_loss = jnp.where(denom > 0, ls / jnp.where(denom > 0, denom, 1.0), 0.0)
    return {"loss": t5_loss + jnp.sum(branch_loss)}


# --------------------------------------------------------------------------- #
# Pure-JAX reference (mirrors the PyTorch math) for a correctness check
# --------------------------------------------------------------------------- #
def reference_forward(params, enc_hidden, dec_hidden, word_index, word_mask,
                      aspect_pos, opinion_pos, aspect_label, opinion_label,
                      prefix_len):
    B, S, D = enc_hidden.shape
    Lw = word_index.shape[1]
    M = aspect_pos.shape[1]
    minv = jnp.min(enc_hidden)
    masked = jnp.where(word_index[..., None] != 0, enc_hidden[:, None], minv)
    word_reps = jnp.max(masked, axis=2)                                # [B,Lw,D]
    asp = word_reps @ params["wa"] + params["ba"]
    opn = word_reps @ params["wo"] + params["bo"]

    def branch(positions, hidden, label):
        markers = dec_hidden[jnp.arange(B)[:, None], positions].reshape(B * M, D)
        enc_rep = jnp.broadcast_to(hidden[:, None], (B, M, Lw, D)).reshape(B * M, Lw, D)
        mask = jnp.broadcast_to(word_mask[:, None], (B, M, Lw)).reshape(B * M, Lw)
        mask = mask * (jnp.arange(Lw)[None, :] >= prefix_len)
        cat = jnp.concatenate(
            [jnp.broadcast_to(markers[:, None, :], enc_rep.shape), enc_rep], -1)
        h = jax.nn.selu(cat @ params["wp"] + params["bp"])
        logits = (h @ params["wc"] + params["bc"]).reshape(-1, 3)
        lbl = label.reshape(-1)
        lse = jax.nn.logsumexp(logits, axis=-1)
        picked = jnp.take_along_axis(logits, lbl[:, None], axis=-1)[:, 0]
        ce = lse - picked
        mflat = mask.reshape(-1)
        return jnp.sum(ce * mflat) / jnp.sum(mflat)

    return branch(aspect_pos, asp, aspect_label) + branch(opinion_pos, opn, opinion_label)


# --------------------------------------------------------------------------- #
if __name__ == "__main__":
    B, S_ENC, S_DEC, D, LW, M, PREFIX = 2, 16, 8, 32, 8, 2, 1

    key = jax.random.PRNGKey(0)
    ks = jax.random.split(key, 12)

    def init(k, shape, scale=0.05):
        return (scale * jax.random.normal(k, shape)).astype(jnp.float32)

    params = {
        "wa": init(ks[0], (D, D)), "ba": init(ks[1], (1, D)),      # aspect_projection
        "wo": init(ks[2], (D, D)), "bo": init(ks[3], (1, D)),      # opinion_projection
        "wp": init(ks[4], (2 * D, D)), "bp": init(ks[5], (1, D)),  # proj
        "wc": init(ks[6], (D, 3)), "bc": init(ks[7], (1, 3)),      # classifier
    }

    # Synthetic T5 outputs (last encoder / decoder hidden states).
    enc_hidden = jax.random.normal(ks[8], (B, S_ENC, D), jnp.float32)
    dec_hidden = jax.random.normal(ks[9], (B, S_DEC, D), jnp.float32)

    # word_index: word w covers subword tokens 2w, 2w+1; word 7 of sample 1 empty.
    wi = np.zeros((B, LW, S_ENC), np.int32)
    for w in range(LW):
        wi[:, w, 2 * w] = 1
        wi[:, w, 2 * w + 1] = 1
    wi[1, 7, :] = 0
    word_index = jnp.asarray(wi)

    wm = np.zeros((B, LW), np.float32)
    wm[:, :6] = 1.0
    word_mask = jnp.asarray(wm)

    # marker_position: value 1 (aspect) at decoder positions 1,3; value 2 (opinion)
    # at positions 2,5 for every sample -> equal marker counts, dense gather.
    aspect_pos = jnp.asarray(np.array([[1, 3]] * B, np.int32))
    opinion_pos = jnp.asarray(np.array([[2, 5]] * B, np.int32))

    aspect_label = jax.random.randint(ks[10], (B, M, LW), 0, 3, jnp.int32)
    opinion_label = jax.random.randint(ks[11], (B, M, LW), 0, 3, jnp.int32)

    out = marker_t5_forward(params, enc_hidden, dec_hidden, word_index, word_mask,
                            aspect_pos, opinion_pos, aspect_label, opinion_label,
                            PREFIX)
    loss = jax.block_until_ready(out["loss"])

    ref = jax.block_until_ready(
        reference_forward(params, enc_hidden, dec_hidden, word_index, word_mask,
                          aspect_pos, opinion_pos, aspect_label, opinion_label,
                          PREFIX))
    np.testing.assert_allclose(np.asarray(loss), np.asarray(ref),
                               rtol=1e-2, atol=1e-2)
    print("KERNEL_OK")
</pallas_src>

<mosaic_0001>
module attributes {stable_mosaic.version = 11 : i64} {
  func.func @word_rep_proj_kernel(%arg0: i32, %arg1: i32, %arg2: memref<1x1xf32, #tpu.memory_space<smem>>, %arg3: memref<1x16x8xi32, #tpu.memory_space<vmem>>, %arg4: memref<1x16x1x32xf32, #tpu.memory_space<vmem>>, %arg5: memref<32x64xbf16, #tpu.memory_space<vmem>>, %arg6: memref<1x64xf32, #tpu.memory_space<vmem>>, %arg7: memref<2x1x8x32xf32, #tpu.memory_space<vmem>>, %arg8: memref<1x8x32xf32, #tpu.memory_space<vmem>>) attributes {dimension_semantics = [#tpu.dimension_semantics<parallel>, #tpu.dimension_semantics<arbitrary>], iteration_bounds = array<i64: 2, 1>, scalar_prefetch = 0 : i64, scratch_operands = 1 : i64, tpu.core_type = #tpu.core_type<tc>, window_params = [{transform_indices = @transform_0, window_bounds = array<i64: 1, 1>}, {transform_indices = @transform_1, window_bounds = array<i64: 1, 16, 8>}, {transform_indices = @transform_2, window_bounds = array<i64: 1, 16, 1, 32>}, {pipeline_mode = #tpu.pipeline_mode<synchronous>, transform_indices = @transform_3, window_bounds = array<i64: 32, 64>}, {pipeline_mode = #tpu.pipeline_mode<synchronous>, transform_indices = @transform_4, window_bounds = array<i64: 1, 64>}, {transform_indices = @transform_5, window_bounds = array<i64: 2, 1, 8, 32>}]} {
    %c0 = arith.constant 0 : index
    %c0_0 = arith.constant 0 : index
    %0 = memref.load %arg2[%c0, %c0_0] : memref<1x1xf32, #tpu.memory_space<smem>>
    %c0_i32 = arith.constant 0 : i32
    %1 = arith.cmpi eq, %arg1, %c0_i32 : i32
    %2 = arith.extui %1 : i1 to i32
    %c0_i32_1 = arith.constant 0 : i32
    %3 = arith.cmpi ne, %2, %c0_i32_1 : i32
    scf.if %3 {
      %295 = vector.broadcast %0 : f32 to vector<1x8x32xf32>
      %c0_197 = arith.constant 0 : index
      %c0_198 = arith.constant 0 : index
      %c0_199 = arith.constant 0 : index
      %296 = vector.load %arg8[%c0_197, %c0_198, %c0_199] : memref<1x8x32xf32, #tpu.memory_space<vmem>>, vector<1x8x32xf32>
      tpu.vector_store %arg8[%c0_197, %c0_198, %c0_199], %295 {strides = array<i32>} : memref<1x8x32xf32, #tpu.memory_space<vmem>>, vector<1x8x32xf32>,
    } else {
    }
    %c0_i32_2 = arith.constant 0 : i32
    %c0_3 = arith.constant 0 : index
    %4 = arith.index_cast %c0_i32_2 : i32 to index
    %c0_4 = arith.constant 0 : index
    %5 = vector.load %arg3[%c0_3, %4, %c0_4] : memref<1x16x8xi32, #tpu.memory_space<vmem>>, vector<1x1x8xi32>
    %6 = vector.shape_cast %5 : vector<1x1x8xi32> to vector<1x8xi32>
    %c0_5 = arith.constant 0 : index
    %7 = arith.index_cast %c0_i32_2 : i32 to index
    %c0_6 = arith.constant 0 : index
    %c0_7 = arith.constant 0 : index
    %8 = vector.load %arg4[%c0_5, %7, %c0_6, %c0_7] : memref<1x16x1x32xf32, #tpu.memory_space<vmem>>, vector<1x1x1x32xf32>
    %9 = vector.shape_cast %8 : vector<1x1x1x32xf32> to vector<1x1x32xf32>
    %10 = vector.shape_cast %6 : vector<1x8xi32> to vector<1x8x1xi32>
    %c0_i32_8 = arith.constant 0 : i32
    %11 = vector.broadcast %c0_i32_8 : i32 to vector<1x8x1xi32>
    %12 = arith.cmpi ne, %10, %11 : vector<1x8x1xi32>
    %13 = vector.shape_cast %12 : vector<1x8x1xi1> to vector<1x8x1xi1>
    %14 = vector.broadcast %13 : vector<1x8x1xi1> to vector<1x8x32xi1>
    %15 = vector.shape_cast %9 : vector<1x1x32xf32> to vector<1x1x32xf32>
    %16 = vector.broadcast %15 : vector<1x1x32xf32> to vector<1x8x32xf32>
    %17 = vector.broadcast %0 : f32 to vector<1x8x32xf32>
    %18 = arith.select %14, %16, %17 : vector<1x8x32xi1>, vector<1x8x32xf32>
    %c0_9 = arith.constant 0 : index
    %c0_10 = arith.constant 0 : index
    %c0_11 = arith.constant 0 : index
    %19 = vector.load %arg8[%c0_9, %c0_10, %c0_11] : memref<1x8x32xf32, #tpu.memory_space<vmem>>, vector<1x8x32xf32>
    %20 = arith.maximumf %19, %18 : vector<1x8x32xf32>
    %c0_12 = arith.constant 0 : index
    %c0_13 = arith.constant 0 : index
    %c0_14 = arith.constant 0 : index
    %21 = vector.load %arg8[%c0_12, %c0_13, %c0_14] : memref<1x8x32xf32, #tpu.memory_space<vmem>>, vector<1x8x32xf32>
    tpu.vector_store %arg8[%c0_12, %c0_13, %c0_14], %20 {strides = array<i32>} : memref<1x8x32xf32, #tpu.memory_space<vmem>>, vector<1x8x32xf32>,
    %c1_i32 = arith.constant 1 : i32
    %c0_15 = arith.constant 0 : index
    %22 = arith.index_cast %c1_i32 : i32 to index
    %c0_16 = arith.constant 0 : index
    %23 = vector.load %arg3[%c0_15, %22, %c0_16] : memref<1x16x8xi32, #tpu.memory_space<vmem>>, vector<1x1x8xi32>
    %24 = vector.shape_cast %23 : vector<1x1x8xi32> to vector<1x8xi32>
    %c0_17 = arith.constant 0 : index
    %25 = arith.index_cast %c1_i32 : i32 to index
    %c0_18 = arith.constant 0 : index
    %c0_19 = arith.constant 0 : index
    %26 = vector.load %arg4[%c0_17, %25, %c0_18, %c0_19] : memref<1x16x1x32xf32, #tpu.memory_space<vmem>>, vector<1x1x1x32xf32>
    %27 = vector.shape_cast %26 : vector<1x1x1x32xf32> to vector<1x1x32xf32>
    %28 = vector.shape_cast %24 : vector<1x8xi32> to vector<1x8x1xi32>
    %c0_i32_20 = arith.constant 0 : i32
    %29 = vector.broadcast %c0_i32_20 : i32 to vector<1x8x1xi32>
    %30 = arith.cmpi ne, %28, %29 : vector<1x8x1xi32>
    %31 = vector.shape_cast %30 : vector<1x8x1xi1> to vector<1x8x1xi1>
    %32 = vector.broadcast %31 : vector<1x8x1xi1> to vector<1x8x32xi1>
    %33 = vector.shape_cast %27 : vector<1x1x32xf32> to vector<1x1x32xf32>
    %34 = vector.broadcast %33 : vector<1x1x32xf32> to vector<1x8x32xf32>
    %35 = vector.broadcast %0 : f32 to vector<1x8x32xf32>
    %36 = arith.select %32, %34, %35 : vector<1x8x32xi1>, vector<1x8x32xf32>
    %c0_21 = arith.constant 0 : index
    %c0_22 = arith.constant 0 : index
    %c0_23 = arith.constant 0 : index
    %37 = vector.load %arg8[%c0_21, %c0_22, %c0_23] : memref<1x8x32xf32, #tpu.memory_space<vmem>>, vector<1x8x32xf32>
    %38 = arith.maximumf %37, %36 : vector<1x8x32xf32>
    %c0_24 = arith.constant 0 : index
    %c0_25 = arith.constant 0 : index
    %c0_26 = arith.constant 0 : index
    %39 = vector.load %arg8[%c0_24, %c0_25, %c0_26] : memref<1x8x32xf32, #tpu.memory_space<vmem>>, vector<1x8x32xf32>
    tpu.vector_store %arg8[%c0_24, %c0_25, %c0_26], %38 {strides = array<i32>} : memref<1x8x32xf32, #tpu.memory_space<vmem>>, vector<1x8x32xf32>,
    %c2_i32 = arith.constant 2 : i32
    %c0_27 = arith.constant 0 : index
    %40 = arith.index_cast %c2_i32 : i32 to index
    %c0_28 = arith.constant 0 : index
    %41 = vector.load %arg3[%c0_27, %40, %c0_28] : memref<1x16x8xi32, #tpu.memory_space<vmem>>, vector<1x1x8xi32>
    %42 = vector.shape_cast %41 : vector<1x1x8xi32> to vector<1x8xi32>
    %c0_29 = arith.constant 0 : index
    %43 = arith.index_cast %c2_i32 : i32 to index
    %c0_30 = arith.constant 0 : index
    %c0_31 = arith.constant 0 : index
    %44 = vector.load %arg4[%c0_29, %43, %c0_30, %c0_31] : memref<1x16x1x32xf32, #tpu.memory_space<vmem>>, vector<1x1x1x32xf32>
    %45 = vector.shape_cast %44 : vector<1x1x1x32xf32> to vector<1x1x32xf32>
    %46 = vector.shape_cast %42 : vector<1x8xi32> to vector<1x8x1xi32>
    %c0_i32_32 = arith.constant 0 : i32
    %47 = vector.broadcast %c0_i32_32 : i32 to vector<1x8x1xi32>
    %48 = arith.cmpi ne, %46, %47 : vector<1x8x1xi32>
    %49 = vector.shape_cast %48 : vector<1x8x1xi1> to vector<1x8x1xi1>
    %50 = vector.broadcast %49 : vector<1x8x1xi1> to vector<1x8x32xi1>
    %51 = vector.shape_cast %45 : vector<1x1x32xf32> to vector<1x1x32xf32>
    %52 = vector.broadcast %51 : vector<1x1x32xf32> to vector<1x8x32xf32>
    %53 = vector.broadcast %0 : f32 to vector<1x8x32xf32>
    %54 = arith.select %50, %52, %53 : vector<1x8x32xi1>, vector<1x8x32xf32>
    %c0_33 = arith.constant 0 : index
    %c0_34 = arith.constant 0 : index
    %c0_35 = arith.constant 0 : index
    %55 = vector.load %arg8[%c0_33, %c0_34, %c0_35] : memref<1x8x32xf32, #tpu.memory_space<vmem>>, vector<1x8x32xf32>
    %56 = arith.maximumf %55, %54 : vector<1x8x32xf32>
    %c0_36 = arith.constant 0 : index
    %c0_37 = arith.constant 0 : index
    %c0_38 = arith.constant 0 : index
    %57 = vector.load %arg8[%c0_36, %c0_37, %c0_38] : memref<1x8x32xf32, #tpu.memory_space<vmem>>, vector<1x8x32xf32>
    tpu.vector_store %arg8[%c0_36, %c0_37, %c0_38], %56 {strides = array<i32>} : memref<1x8x32xf32, #tpu.memory_space<vmem>>, vector<1x8x32xf32>,
    %c3_i32 = arith.constant 3 : i32
    %c0_39 = arith.constant 0 : index
    %58 = arith.index_cast %c3_i32 : i32 to index
    %c0_40 = arith.constant 0 : index
    %59 = vector.load %arg3[%c0_39, %58, %c0_40] : memref<1x16x8xi32, #tpu.memory_space<vmem>>, vector<1x1x8xi32>
    %60 = vector.shape_cast %59 : vector<1x1x8xi32> to vector<1x8xi32>
    %c0_41 = arith.constant 0 : index
    %61 = arith.index_cast %c3_i32 : i32 to index
    %c0_42 = arith.constant 0 : index
    %c0_43 = arith.constant 0 : index
    %62 = vector.load %arg4[%c0_41, %61, %c0_42, %c0_43] : memref<1x16x1x32xf32, #tpu.memory_space<vmem>>, vector<1x1x1x32xf32>
    %63 = vector.shape_cast %62 : vector<1x1x1x32xf32> to vector<1x1x32xf32>
    %64 = vector.shape_cast %60 : vector<1x8xi32> to vector<1x8x1xi32>
    %c0_i32_44 = arith.constant 0 : i32
    %65 = vector.broadcast %c0_i32_44 : i32 to vector<1x8x1xi32>
    %66 = arith.cmpi ne, %64, %65 : vector<1x8x1xi32>
    %67 = vector.shape_cast %66 : vector<1x8x1xi1> to vector<1x8x1xi1>
    %68 = vector.broadcast %67 : vector<1x8x1xi1> to vector<1x8x32xi1>
    %69 = vector.shape_cast %63 : vector<1x1x32xf32> to vector<1x1x32xf32>
    %70 = vector.broadcast %69 : vector<1x1x32xf32> to vector<1x8x32xf32>
    %71 = vector.broadcast %0 : f32 to vector<1x8x32xf32>
    %72 = arith.select %68, %70, %71 : vector<1x8x32xi1>, vector<1x8x32xf32>
    %c0_45 = arith.constant 0 : index
    %c0_46 = arith.constant 0 : index
    %c0_47 = arith.constant 0 : index
    %73 = vector.load %arg8[%c0_45, %c0_46, %c0_47] : memref<1x8x32xf32, #tpu.memory_space<vmem>>, vector<1x8x32xf32>
    %74 = arith.maximumf %73, %72 : vector<1x8x32xf32>
    %c0_48 = arith.constant 0 : index
    %c0_49 = arith.constant 0 : index
    %c0_50 = arith.constant 0 : index
    %75 = vector.load %arg8[%c0_48, %c0_49, %c0_50] : memref<1x8x32xf32, #tpu.memory_space<vmem>>, vector<1x8x32xf32>
    tpu.vector_store %arg8[%c0_48, %c0_49, %c0_50], %74 {strides = array<i32>} : memref<1x8x32xf32, #tpu.memory_space<vmem>>, vector<1x8x32xf32>,
    %c4_i32 = arith.constant 4 : i32
    %c0_51 = arith.constant 0 : index
    %76 = arith.index_cast %c4_i32 : i32 to index
    %c0_52 = arith.constant 0 : index
    %77 = vector.load %arg3[%c0_51, %76, %c0_52] : memref<1x16x8xi32, #tpu.memory_space<vmem>>, vector<1x1x8xi32>
    %78 = vector.shape_cast %77 : vector<1x1x8xi32> to vector<1x8xi32>
    %c0_53 = arith.constant 0 : index
    %79 = arith.index_cast %c4_i32 : i32 to index
    %c0_54 = arith.constant 0 : index
    %c0_55 = arith.constant 0 : index
    %80 = vector.load %arg4[%c0_53, %79, %c0_54, %c0_55] : memref<1x16x1x32xf32, #tpu.memory_space<vmem>>, vector<1x1x1x32xf32>
    %81 = vector.shape_cast %80 : vector<1x1x1x32xf32> to vector<1x1x32xf32>
    %82 = vector.shape_cast %78 : vector<1x8xi32> to vector<1x8x1xi32>
    %c0_i32_56 = arith.constant 0 : i32
    %83 = vector.broadcast %c0_i32_56 : i32 to vector<1x8x1xi32>
    %84 = arith.cmpi ne, %82, %83 : vector<1x8x1xi32>
    %85 = vector.shape_cast %84 : vector<1x8x1xi1> to vector<1x8x1xi1>
    %86 = vector.broadcast %85 : vector<1x8x1xi1> to vector<1x8x32xi1>
    %87 = vector.shape_cast %81 : vector<1x1x32xf32> to vector<1x1x32xf32>
    %88 = vector.broadcast %87 : vector<1x1x32xf32> to vector<1x8x32xf32>
    %89 = vector.broadcast %0 : f32 to vector<1x8x32xf32>
    %90 = arith.select %86, %88, %89 : vector<1x8x32xi1>, vector<1x8x32xf32>
    %c0_57 = arith.constant 0 : index
    %c0_58 = arith.constant 0 : index
    %c0_59 = arith.constant 0 : index
    %91 = vector.load %arg8[%c0_57, %c0_58, %c0_59] : memref<1x8x32xf32, #tpu.memory_space<vmem>>, vector<1x8x32xf32>
    %92 = arith.maximumf %91, %90 : vector<1x8x32xf32>
    %c0_60 = arith.constant 0 : index
    %c0_61 = arith.constant 0 : index
    %c0_62 = arith.constant 0 : index
    %93 = vector.load %arg8[%c0_60, %c0_61, %c0_62] : memref<1x8x32xf32, #tpu.memory_space<vmem>>, vector<1x8x32xf32>
    tpu.vector_store %arg8[%c0_60, %c0_61, %c0_62], %92 {strides = array<i32>} : memref<1x8x32xf32, #tpu.memory_space<vmem>>, vector<1x8x32xf32>,
    %c5_i32 = arith.constant 5 : i32
    %c0_63 = arith.constant 0 : index
    %94 = arith.index_cast %c5_i32 : i32 to index
    %c0_64 = arith.constant 0 : index
    %95 = vector.load %arg3[%c0_63, %94, %c0_64] : memref<1x16x8xi32, #tpu.memory_space<vmem>>, vector<1x1x8xi32>
    %96 = vector.shape_cast %95 : vector<1x1x8xi32> to vector<1x8xi32>
    %c0_65 = arith.constant 0 : index
    %97 = arith.index_cast %c5_i32 : i32 to index
    %c0_66 = arith.constant 0 : index
    %c0_67 = arith.constant 0 : index
    %98 = vector.load %arg4[%c0_65, %97, %c0_66, %c0_67] : memref<1x16x1x32xf32, #tpu.memory_space<vmem>>, vector<1x1x1x32xf32>
    %99 = vector.shape_cast %98 : vector<1x1x1x32xf32> to vector<1x1x32xf32>
    %100 = vector.shape_cast %96 : vector<1x8xi32> to vector<1x8x1xi32>
    %c0_i32_68 = arith.constant 0 : i32
    %101 = vector.broadcast %c0_i32_68 : i32 to vector<1x8x1xi32>
    %102 = arith.cmpi ne, %100, %101 : vector<1x8x1xi32>
    %103 = vector.shape_cast %102 : vector<1x8x1xi1> to vector<1x8x1xi1>
    %104 = vector.broadcast %103 : vector<1x8x1xi1> to vector<1x8x32xi1>
    %105 = vector.shape_cast %99 : vector<1x1x32xf32> to vector<1x1x32xf32>
    %106 = vector.broadcast %105 : vector<1x1x32xf32> to vector<1x8x32xf32>
    %107 = vector.broadcast %0 : f32 to vector<1x8x32xf32>
    %108 = arith.select %104, %106, %107 : vector<1x8x32xi1>, vector<1x8x32xf32>
    %c0_69 = arith.constant 0 : index
    %c0_70 = arith.constant 0 : index
    %c0_71 = arith.constant 0 : index
    %109 = vector.load %arg8[%c0_69, %c0_70, %c0_71] : memref<1x8x32xf32, #tpu.memory_space<vmem>>, vector<1x8x32xf32>
    %110 = arith.maximumf %109, %108 : vector<1x8x32xf32>
    %c0_72 = arith.constant 0 : index
    %c0_73 = arith.constant 0 : index
    %c0_74 = arith.constant 0 : index
    %111 = vector.load %arg8[%c0_72, %c0_73, %c0_74] : memref<1x8x32xf32, #tpu.memory_space<vmem>>, vector<1x8x32xf32>
    tpu.vector_store %arg8[%c0_72, %c0_73, %c0_74], %110 {strides = array<i32>} : memref<1x8x32xf32, #tpu.memory_space<vmem>>, vector<1x8x32xf32>,
    %c6_i32 = arith.constant 6 : i32
    %c0_75 = arith.constant 0 : index
    %112 = arith.index_cast %c6_i32 : i32 to index
    %c0_76 = arith.constant 0 : index
    %113 = vector.load %arg3[%c0_75, %112, %c0_76] : memref<1x16x8xi32, #tpu.memory_space<vmem>>, vector<1x1x8xi32>
    %114 = vector.shape_cast %113 : vector<1x1x8xi32> to vector<1x8xi32>
    %c0_77 = arith.constant 0 : index
    %115 = arith.index_cast %c6_i32 : i32 to index
    %c0_78 = arith.constant 0 : index
    %c0_79 = arith.constant 0 : index
    %116 = vector.load %arg4[%c0_77, %115, %c0_78, %c0_79] : memref<1x16x1x32xf32, #tpu.memory_space<vmem>>, vector<1x1x1x32xf32>
    %117 = vector.shape_cast %116 : vector<1x1x1x32xf32> to vector<1x1x32xf32>
    %118 = vector.shape_cast %114 : vector<1x8xi32> to vector<1x8x1xi32>
    %c0_i32_80 = arith.constant 0 : i32
    %119 = vector.broadcast %c0_i32_80 : i32 to vector<1x8x1xi32>
    %120 = arith.cmpi ne, %118, %119 : vector<1x8x1xi32>
    %121 = vector.shape_cast %120 : vector<1x8x1xi1> to vector<1x8x1xi1>
    %122 = vector.broadcast %121 : vector<1x8x1xi1> to vector<1x8x32xi1>
    %123 = vector.shape_cast %117 : vector<1x1x32xf32> to vector<1x1x32xf32>
    %124 = vector.broadcast %123 : vector<1x1x32xf32> to vector<1x8x32xf32>
    %125 = vector.broadcast %0 : f32 to vector<1x8x32xf32>
    %126 = arith.select %122, %124, %125 : vector<1x8x32xi1>, vector<1x8x32xf32>
    %c0_81 = arith.constant 0 : index
    %c0_82 = arith.constant 0 : index
    %c0_83 = arith.constant 0 : index
    %127 = vector.load %arg8[%c0_81, %c0_82, %c0_83] : memref<1x8x32xf32, #tpu.memory_space<vmem>>, vector<1x8x32xf32>
    %128 = arith.maximumf %127, %126 : vector<1x8x32xf32>
    %c0_84 = arith.constant 0 : index
    %c0_85 = arith.constant 0 : index
    %c0_86 = arith.constant 0 : index
    %129 = vector.load %arg8[%c0_84, %c0_85, %c0_86] : memref<1x8x32xf32, #tpu.memory_space<vmem>>, vector<1x8x32xf32>
    tpu.vector_store %arg8[%c0_84, %c0_85, %c0_86], %128 {strides = array<i32>} : memref<1x8x32xf32, #tpu.memory_space<vmem>>, vector<1x8x32xf32>,
    %c7_i32 = arith.constant 7 : i32
    %c0_87 = arith.constant 0 : index
    %130 = arith.index_cast %c7_i32 : i32 to index
    %c0_88 = arith.constant 0 : index
    %131 = vector.load %arg3[%c0_87, %130, %c0_88] : memref<1x16x8xi32, #tpu.memory_space<vmem>>, vector<1x1x8xi32>
    %132 = vector.shape_cast %131 : vector<1x1x8xi32> to vector<1x8xi32>
    %c0_89 = arith.constant 0 : index
    %133 = arith.index_cast %c7_i32 : i32 to index
    %c0_90 = arith.constant 0 : index
    %c0_91 = arith.constant 0 : index
    %134 = vector.load %arg4[%c0_89, %133, %c0_90, %c0_91] : memref<1x16x1x32xf32, #tpu.memory_space<vmem>>, vector<1x1x1x32xf32>
    %135 = vector.shape_cast %134 : vector<1x1x1x32xf32> to vector<1x1x32xf32>
    %136 = vector.shape_cast %132 : vector<1x8xi32> to vector<1x8x1xi32>
    %c0_i32_92 = arith.constant 0 : i32
    %137 = vector.broadcast %c0_i32_92 : i32 to vector<1x8x1xi32>
    %138 = arith.cmpi ne, %136, %137 : vector<1x8x1xi32>
    %139 = vector.shape_cast %138 : vector<1x8x1xi1> to vector<1x8x1xi1>
    %140 = vector.broadcast %139 : vector<1x8x1xi1> to vector<1x8x32xi1>
    %141 = vector.shape_cast %135 : vector<1x1x32xf32> to vector<1x1x32xf32>
    %142 = vector.broadcast %141 : vector<1x1x32xf32> to vector<1x8x32xf32>
    %143 = vector.broadcast %0 : f32 to vector<1x8x32xf32>
    %144 = arith.select %140, %142, %143 : vector<1x8x32xi1>, vector<1x8x32xf32>
    %c0_93 = arith.constant 0 : index
    %c0_94 = arith.constant 0 : index
    %c0_95 = arith.constant 0 : index
    %145 = vector.load %arg8[%c0_93, %c0_94, %c0_95] : memref<1x8x32xf32, #tpu.memory_space<vmem>>, vector<1x8x32xf32>
    %146 = arith.maximumf %145, %144 : vector<1x8x32xf32>
    %c0_96 = arith.constant 0 : index
    %c0_97 = arith.constant 0 : index
    %c0_98 = arith.constant 0 : index
    %147 = vector.load %arg8[%c0_96, %c0_97, %c0_98] : memref<1x8x32xf32, #tpu.memory_space<vmem>>, vector<1x8x32xf32>
    tpu.vector_store %arg8[%c0_96, %c0_97, %c0_98], %146 {strides = array<i32>} : memref<1x8x32xf32, #tpu.memory_space<vmem>>, vector<1x8x32xf32>,
    %c8_i32 = arith.constant 8 : i32
    %c0_99 = arith.constant 0 : index
    %148 = arith.index_cast %c8_i32 : i32 to index
    %c0_100 = arith.constant 0 : index
    %149 = vector.load %arg3[%c0_99, %148, %c0_100] : memref<1x16x8xi32, #tpu.memory_space<vmem>>, vector<1x1x8xi32>
    %150 = vector.shape_cast %149 : vector<1x1x8xi32> to vector<1x8xi32>
    %c0_101 = arith.constant 0 : index
    %151 = arith.index_cast %c8_i32 : i32 to index
    %c0_102 = arith.constant 0 : index
    %c0_103 = arith.constant 0 : index
    %152 = vector.load %arg4[%c0_101, %151, %c0_102, %c0_103] : memref<1x16x1x32xf32, #tpu.memory_space<vmem>>, vector<1x1x1x32xf32>
    %153 = vector.shape_cast %152 : vector<1x1x1x32xf32> to vector<1x1x32xf32>
    %154 = vector.shape_cast %150 : vector<1x8xi32> to vector<1x8x1xi32>
    %c0_i32_104 = arith.constant 0 : i32
    %155 = vector.broadcast %c0_i32_104 : i32 to vector<1x8x1xi32>
    %156 = arith.cmpi ne, %154, %155 : vector<1x8x1xi32>
    %157 = vector.shape_cast %156 : vector<1x8x1xi1> to vector<1x8x1xi1>
    %158 = vector.broadcast %157 : vector<1x8x1xi1> to vector<1x8x32xi1>
    %159 = vector.shape_cast %153 : vector<1x1x32xf32> to vector<1x1x32xf32>
    %160 = vector.broadcast %159 : vector<1x1x32xf32> to vector<1x8x32xf32>
    %161 = vector.broadcast %0 : f32 to vector<1x8x32xf32>
    %162 = arith.select %158, %160, %161 : vector<1x8x32xi1>, vector<1x8x32xf32>
    %c0_105 = arith.constant 0 : index
    %c0_106 = arith.constant 0 : index
    %c0_107 = arith.constant 0 : index
    %163 = vector.load %arg8[%c0_105, %c0_106, %c0_107] : memref<1x8x32xf32, #tpu.memory_space<vmem>>, vector<1x8x32xf32>
    %164 = arith.maximumf %163, %162 : vector<1x8x32xf32>
    %c0_108 = arith.constant 0 : index
    %c0_109 = arith.constant 0 : index
    %c0_110 = arith.constant 0 : index
    %165 = vector.load %arg8[%c0_108, %c0_109, %c0_110] : memref<1x8x32xf32, #tpu.memory_space<vmem>>, vector<1x8x32xf32>
    tpu.vector_store %arg8[%c0_108, %c0_109, %c0_110], %164 {strides = array<i32>} : memref<1x8x32xf32, #tpu.memory_space<vmem>>, vector<1x8x32xf32>,
    %c9_i32 = arith.constant 9 : i32
    %c0_111 = arith.constant 0 : index
    %166 = arith.index_cast %c9_i32 : i32 to index
    %c0_112 = arith.constant 0 : index
    %167 = vector.load %arg3[%c0_111, %166, %c0_112] : memref<1x16x8xi32, #tpu.memory_space<vmem>>, vector<1x1x8xi32>
    %168 = vector.shape_cast %167 : vector<1x1x8xi32> to vector<1x8xi32>
    %c0_113 = arith.constant 0 : index
    %169 = arith.index_cast %c9_i32 : i32 to index
    %c0_114 = arith.constant 0 : index
    %c0_115 = arith.constant 0 : index
    %170 = vector.load %arg4[%c0_113, %169, %c0_114, %c0_115] : memref<1x16x1x32xf32, #tpu.memory_space<vmem>>, vector<1x1x1x32xf32>
    %171 = vector.shape_cast %170 : vector<1x1x1x32xf32> to vector<1x1x32xf32>
    %172 = vector.shape_cast %168 : vector<1x8xi32> to vector<1x8x1xi32>
    %c0_i32_116 = arith.constant 0 : i32
    %173 = vector.broadcast %c0_i32_116 : i32 to vector<1x8x1xi32>
    %174 = arith.cmpi ne, %172, %173 : vector<1x8x1xi32>
    %175 = vector.shape_cast %174 : vector<1x8x1xi1> to vector<1x8x1xi1>
    %176 = vector.broadcast %175 : vector<1x8x1xi1> to vector<1x8x32xi1>
    %177 = vector.shape_cast %171 : vector<1x1x32xf32> to vector<1x1x32xf32>
    %178 = vector.broadcast %177 : vector<1x1x32xf32> to vector<1x8x32xf32>
    %179 = vector.broadcast %0 : f32 to vector<1x8x32xf32>
    %180 = arith.select %176, %178, %179 : vector<1x8x32xi1>, vector<1x8x32xf32>
    %c0_117 = arith.constant 0 : index
    %c0_118 = arith.constant 0 : index
    %c0_119 = arith.constant 0 : index
    %181 = vector.load %arg8[%c0_117, %c0_118, %c0_119] : memref<1x8x32xf32, #tpu.memory_space<vmem>>, vector<1x8x32xf32>
    %182 = arith.maximumf %181, %180 : vector<1x8x32xf32>
    %c0_120 = arith.constant 0 : index
    %c0_121 = arith.constant 0 : index
    %c0_122 = arith.constant 0 : index
    %183 = vector.load %arg8[%c0_120, %c0_121, %c0_122] : memref<1x8x32xf32, #tpu.memory_space<vmem>>, vector<1x8x32xf32>
    tpu.vector_store %arg8[%c0_120, %c0_121, %c0_122], %182 {strides = array<i32>} : memref<1x8x32xf32, #tpu.memory_space<vmem>>, vector<1x8x32xf32>,
    %c10_i32 = arith.constant 10 : i32
    %c0_123 = arith.constant 0 : index
    %184 = arith.index_cast %c10_i32 : i32 to index
    %c0_124 = arith.constant 0 : index
    %185 = vector.load %arg3[%c0_123, %184, %c0_124] : memref<1x16x8xi32, #tpu.memory_space<vmem>>, vector<1x1x8xi32>
    %186 = vector.shape_cast %185 : vector<1x1x8xi32> to vector<1x8xi32>
    %c0_125 = arith.constant 0 : index
    %187 = arith.index_cast %c10_i32 : i32 to index
    %c0_126 = arith.constant 0 : index
    %c0_127 = arith.constant 0 : index
    %188 = vector.load %arg4[%c0_125, %187, %c0_126, %c0_127] : memref<1x16x1x32xf32, #tpu.memory_space<vmem>>, vector<1x1x1x32xf32>
    %189 = vector.shape_cast %188 : vector<1x1x1x32xf32> to vector<1x1x32xf32>
    %190 = vector.shape_cast %186 : vector<1x8xi32> to vector<1x8x1xi32>
    %c0_i32_128 = arith.constant 0 : i32
    %191 = vector.broadcast %c0_i32_128 : i32 to vector<1x8x1xi32>
    %192 = arith.cmpi ne, %190, %191 : vector<1x8x1xi32>
    %193 = vector.shape_cast %192 : vector<1x8x1xi1> to vector<1x8x1xi1>
    %194 = vector.broadcast %193 : vector<1x8x1xi1> to vector<1x8x32xi1>
    %195 = vector.shape_cast %189 : vector<1x1x32xf32> to vector<1x1x32xf32>
    %196 = vector.broadcast %195 : vector<1x1x32xf32> to vector<1x8x32xf32>
    %197 = vector.broadcast %0 : f32 to vector<1x8x32xf32>
    %198 = arith.select %194, %196, %197 : vector<1x8x32xi1>, vector<1x8x32xf32>
    %c0_129 = arith.constant 0 : index
    %c0_130 = arith.constant 0 : index
    %c0_131 = arith.constant 0 : index
    %199 = vector.load %arg8[%c0_129, %c0_130, %c0_131] : memref<1x8x32xf32, #tpu.memory_space<vmem>>, vector<1x8x32xf32>
    %200 = arith.maximumf %199, %198 : vector<1x8x32xf32>
    %c0_132 = arith.constant 0 : index
    %c0_133 = arith.constant 0 : index
    %c0_134 = arith.constant 0 : index
    %201 = vector.load %arg8[%c0_132, %c0_133, %c0_134] : memref<1x8x32xf32, #tpu.memory_space<vmem>>, vector<1x8x32xf32>
    tpu.vector_store %arg8[%c0_132, %c0_133, %c0_134], %200 {strides = array<i32>} : memref<1x8x32xf32, #tpu.memory_space<vmem>>, vector<1x8x32xf32>,
    %c11_i32 = arith.constant 11 : i32
    %c0_135 = arith.constant 0 : index
    %202 = arith.index_cast %c11_i32 : i32 to index
    %c0_136 = arith.constant 0 : index
    %203 = vector.load %arg3[%c0_135, %202, %c0_136] : memref<1x16x8xi32, #tpu.memory_space<vmem>>, vector<1x1x8xi32>
    %204 = vector.shape_cast %203 : vector<1x1x8xi32> to vector<1x8xi32>
    %c0_137 = arith.constant 0 : index
    %205 = arith.index_cast %c11_i32 : i32 to index
    %c0_138 = arith.constant 0 : index
    %c0_139 = arith.constant 0 : index
    %206 = vector.load %arg4[%c0_137, %205, %c0_138, %c0_139] : memref<1x16x1x32xf32, #tpu.memory_space<vmem>>, vector<1x1x1x32xf32>
    %207 = vector.shape_cast %206 : vector<1x1x1x32xf32> to vector<1x1x32xf32>
    %208 = vector.shape_cast %204 : vector<1x8xi32> to vector<1x8x1xi32>
    %c0_i32_140 = arith.constant 0 : i32
    %209 = vector.broadcast %c0_i32_140 : i32 to vector<1x8x1xi32>
    %210 = arith.cmpi ne, %208, %209 : vector<1x8x1xi32>
    %211 = vector.shape_cast %210 : vector<1x8x1xi1> to vector<1x8x1xi1>
    %212 = vector.broadcast %211 : vector<1x8x1xi1> to vector<1x8x32xi1>
    %213 = vector.shape_cast %207 : vector<1x1x32xf32> to vector<1x1x32xf32>
    %214 = vector.broadcast %213 : vector<1x1x32xf32> to vector<1x8x32xf32>
    %215 = vector.broadcast %0 : f32 to vector<1x8x32xf32>
    %216 = arith.select %212, %214, %215 : vector<1x8x32xi1>, vector<1x8x32xf32>
    %c0_141 = arith.constant 0 : index
    %c0_142 = arith.constant 0 : index
    %c0_143 = arith.constant 0 : index
    %217 = vector.load %arg8[%c0_141, %c0_142, %c0_143] : memref<1x8x32xf32, #tpu.memory_space<vmem>>, vector<1x8x32xf32>
    %218 = arith.maximumf %217, %216 : vector<1x8x32xf32>
    %c0_144 = arith.constant 0 : index
    %c0_145 = arith.constant 0 : index
    %c0_146 = arith.constant 0 : index
    %219 = vector.load %arg8[%c0_144, %c0_145, %c0_146] : memref<1x8x32xf32, #tpu.memory_space<vmem>>, vector<1x8x32xf32>
    tpu.vector_store %arg8[%c0_144, %c0_145, %c0_146], %218 {strides = array<i32>} : memref<1x8x32xf32, #tpu.memory_space<vmem>>, vector<1x8x32xf32>,
    %c12_i32 = arith.constant 12 : i32
    %c0_147 = arith.constant 0 : index
    %220 = arith.index_cast %c12_i32 : i32 to index
    %c0_148 = arith.constant 0 : index
    %221 = vector.load %arg3[%c0_147, %220, %c0_148] : memref<1x16x8xi32, #tpu.memory_space<vmem>>, vector<1x1x8xi32>
    %222 = vector.shape_cast %221 : vector<1x1x8xi32> to vector<1x8xi32>
    %c0_149 = arith.constant 0 : index
    %223 = arith.index_cast %c12_i32 : i32 to index
    %c0_150 = arith.constant 0 : index
    %c0_151 = arith.constant 0 : index
    %224 = vector.load %arg4[%c0_149, %223, %c0_150, %c0_151] : memref<1x16x1x32xf32, #tpu.memory_space<vmem>>, vector<1x1x1x32xf32>
    %225 = vector.shape_cast %224 : vector<1x1x1x32xf32> to vector<1x1x32xf32>
    %226 = vector.shape_cast %222 : vector<1x8xi32> to vector<1x8x1xi32>
    %c0_i32_152 = arith.constant 0 : i32
    %227 = vector.broadcast %c0_i32_152 : i32 to vector<1x8x1xi32>
    %228 = arith.cmpi ne, %226, %227 : vector<1x8x1xi32>
    %229 = vector.shape_cast %228 : vector<1x8x1xi1> to vector<1x8x1xi1>
    %230 = vector.broadcast %229 : vector<1x8x1xi1> to vector<1x8x32xi1>
    %231 = vector.shape_cast %225 : vector<1x1x32xf32> to vector<1x1x32xf32>
    %232 = vector.broadcast %231 : vector<1x1x32xf32> to vector<1x8x32xf32>
    %233 = vector.broadcast %0 : f32 to vector<1x8x32xf32>
    %234 = arith.select %230, %232, %233 : vector<1x8x32xi1>, vector<1x8x32xf32>
    %c0_153 = arith.constant 0 : index
    %c0_154 = arith.constant 0 : index
    %c0_155 = arith.constant 0 : index
    %235 = vector.load %arg8[%c0_153, %c0_154, %c0_155] : memref<1x8x32xf32, #tpu.memory_space<vmem>>, vector<1x8x32xf32>
    %236 = arith.maximumf %235, %234 : vector<1x8x32xf32>
    %c0_156 = arith.constant 0 : index
    %c0_157 = arith.constant 0 : index
    %c0_158 = arith.constant 0 : index
    %237 = vector.load %arg8[%c0_156, %c0_157, %c0_158] : memref<1x8x32xf32, #tpu.memory_space<vmem>>, vector<1x8x32xf32>
    tpu.vector_store %arg8[%c0_156, %c0_157, %c0_158], %236 {strides = array<i32>} : memref<1x8x32xf32, #tpu.memory_space<vmem>>, vector<1x8x32xf32>,
    %c13_i32 = arith.constant 13 : i32
    %c0_159 = arith.constant 0 : index
    %238 = arith.index_cast %c13_i32 : i32 to index
    %c0_160 = arith.constant 0 : index
    %239 = vector.load %arg3[%c0_159, %238, %c0_160] : memref<1x16x8xi32, #tpu.memory_space<vmem>>, vector<1x1x8xi32>
    %240 = vector.shape_cast %239 : vector<1x1x8xi32> to vector<1x8xi32>
    %c0_161 = arith.constant 0 : index
    %241 = arith.index_cast %c13_i32 : i32 to index
    %c0_162 = arith.constant 0 : index
    %c0_163 = arith.constant 0 : index
    %242 = vector.load %arg4[%c0_161, %241, %c0_162, %c0_163] : memref<1x16x1x32xf32, #tpu.memory_space<vmem>>, vector<1x1x1x32xf32>
    %243 = vector.shape_cast %242 : vector<1x1x1x32xf32> to vector<1x1x32xf32>
    %244 = vector.shape_cast %240 : vector<1x8xi32> to vector<1x8x1xi32>
    %c0_i32_164 = arith.constant 0 : i32
    %245 = vector.broadcast %c0_i32_164 : i32 to vector<1x8x1xi32>
    %246 = arith.cmpi ne, %244, %245 : vector<1x8x1xi32>
    %247 = vector.shape_cast %246 : vector<1x8x1xi1> to vector<1x8x1xi1>
    %248 = vector.broadcast %247 : vector<1x8x1xi1> to vector<1x8x32xi1>
    %249 = vector.shape_cast %243 : vector<1x1x32xf32> to vector<1x1x32xf32>
    %250 = vector.broadcast %249 : vector<1x1x32xf32> to vector<1x8x32xf32>
    %251 = vector.broadcast %0 : f32 to vector<1x8x32xf32>
    %252 = arith.select %248, %250, %251 : vector<1x8x32xi1>, vector<1x8x32xf32>
    %c0_165 = arith.constant 0 : index
    %c0_166 = arith.constant 0 : index
    %c0_167 = arith.constant 0 : index
    %253 = vector.load %arg8[%c0_165, %c0_166, %c0_167] : memref<1x8x32xf32, #tpu.memory_space<vmem>>, vector<1x8x32xf32>
    %254 = arith.maximumf %253, %252 : vector<1x8x32xf32>
    %c0_168 = arith.constant 0 : index
    %c0_169 = arith.constant 0 : index
    %c0_170 = arith.constant 0 : index
    %255 = vector.load %arg8[%c0_168, %c0_169, %c0_170] : memref<1x8x32xf32, #tpu.memory_space<vmem>>, vector<1x8x32xf32>
    tpu.vector_store %arg8[%c0_168, %c0_169, %c0_170], %254 {strides = array<i32>} : memref<1x8x32xf32, #tpu.memory_space<vmem>>, vector<1x8x32xf32>,
    %c14_i32 = arith.constant 14 : i32
    %c0_171 = arith.constant 0 : index
    %256 = arith.index_cast %c14_i32 : i32 to index
    %c0_172 = arith.constant 0 : index
    %257 = vector.load %arg3[%c0_171, %256, %c0_172] : memref<1x16x8xi32, #tpu.memory_space<vmem>>, vector<1x1x8xi32>
    %258 = vector.shape_cast %257 : vector<1x1x8xi32> to vector<1x8xi32>
    %c0_173 = arith.constant 0 : index
    %259 = arith.index_cast %c14_i32 : i32 to index
    %c0_174 = arith.constant 0 : index
    %c0_175 = arith.constant 0 : index
    %260 = vector.load %arg4[%c0_173, %259, %c0_174, %c0_175] : memref<1x16x1x32xf32, #tpu.memory_space<vmem>>, vector<1x1x1x32xf32>
    %261 = vector.shape_cast %260 : vector<1x1x1x32xf32> to vector<1x1x32xf32>
    %262 = vector.shape_cast %258 : vector<1x8xi32> to vector<1x8x1xi32>
    %c0_i32_176 = arith.constant 0 : i32
    %263 = vector.broadcast %c0_i32_176 : i32 to vector<1x8x1xi32>
    %264 = arith.cmpi ne, %262, %263 : vector<1x8x1xi32>
    %265 = vector.shape_cast %264 : vector<1x8x1xi1> to vector<1x8x1xi1>
    %266 = vector.broadcast %265 : vector<1x8x1xi1> to vector<1x8x32xi1>
    %267 = vector.shape_cast %261 : vector<1x1x32xf32> to vector<1x1x32xf32>
    %268 = vector.broadcast %267 : vector<1x1x32xf32> to vector<1x8x32xf32>
    %269 = vector.broadcast %0 : f32 to vector<1x8x32xf32>
    %270 = arith.select %266, %268, %269 : vector<1x8x32xi1>, vector<1x8x32xf32>
    %c0_177 = arith.constant 0 : index
    %c0_178 = arith.constant 0 : index
    %c0_179 = arith.constant 0 : index
    %271 = vector.load %arg8[%c0_177, %c0_178, %c0_179] : memref<1x8x32xf32, #tpu.memory_space<vmem>>, vector<1x8x32xf32>
    %272 = arith.maximumf %271, %270 : vector<1x8x32xf32>
    %c0_180 = arith.constant 0 : index
    %c0_181 = arith.constant 0 : index
    %c0_182 = arith.constant 0 : index
    %273 = vector.load %arg8[%c0_180, %c0_181, %c0_182] : memref<1x8x32xf32, #tpu.memory_space<vmem>>, vector<1x8x32xf32>
    tpu.vector_store %arg8[%c0_180, %c0_181, %c0_182], %272 {strides = array<i32>} : memref<1x8x32xf32, #tpu.memory_space<vmem>>, vector<1x8x32xf32>,
    %c15_i32 = arith.constant 15 : i32
    %c0_183 = arith.constant 0 : index
    %274 = arith.index_cast %c15_i32 : i32 to index
    %c0_184 = arith.constant 0 : index
    %275 = vector.load %arg3[%c0_183, %274, %c0_184] : memref<1x16x8xi32, #tpu.memory_space<vmem>>, vector<1x1x8xi32>
    %276 = vector.shape_cast %275 : vector<1x1x8xi32> to vector<1x8xi32>
    %c0_185 = arith.constant 0 : index
    %277 = arith.index_cast %c15_i32 : i32 to index
    %c0_186 = arith.constant 0 : index
    %c0_187 = arith.constant 0 : index
    %278 = vector.load %arg4[%c0_185, %277, %c0_186, %c0_187] : memref<1x16x1x32xf32, #tpu.memory_space<vmem>>, vector<1x1x1x32xf32>
    %279 = vector.shape_cast %278 : vector<1x1x1x32xf32> to vector<1x1x32xf32>
    %280 = vector.shape_cast %276 : vector<1x8xi32> to vector<1x8x1xi32>
    %c0_i32_188 = arith.constant 0 : i32
    %281 = vector.broadcast %c0_i32_188 : i32 to vector<1x8x1xi32>
    %282 = arith.cmpi ne, %280, %281 : vector<1x8x1xi32>
    %283 = vector.shape_cast %282 : vector<1x8x1xi1> to vector<1x8x1xi1>
    %284 = vector.broadcast %283 : vector<1x8x1xi1> to vector<1x8x32xi1>
    %285 = vector.shape_cast %279 : vector<1x1x32xf32> to vector<1x1x32xf32>
    %286 = vector.broadcast %285 : vector<1x1x32xf32> to vector<1x8x32xf32>
    %287 = vector.broadcast %0 : f32 to vector<1x8x32xf32>
    %288 = arith.select %284, %286, %287 : vector<1x8x32xi1>, vector<1x8x32xf32>
    %c0_189 = arith.constant 0 : index
    %c0_190 = arith.constant 0 : index
    %c0_191 = arith.constant 0 : index
    %289 = vector.load %arg8[%c0_189, %c0_190, %c0_191] : memref<1x8x32xf32, #tpu.memory_space<vmem>>, vector<1x8x32xf32>
    %290 = arith.maximumf %289, %288 : vector<1x8x32xf32>
    %c0_192 = arith.constant 0 : index
    %c0_193 = arith.constant 0 : index
    %c0_194 = arith.constant 0 : index
    %291 = vector.load %arg8[%c0_192, %c0_193, %c0_194] : memref<1x8x32xf32, #tpu.memory_space<vmem>>, vector<1x8x32xf32>
    tpu.vector_store %arg8[%c0_192, %c0_193, %c0_194], %290 {strides = array<i32>} : memref<1x8x32xf32, #tpu.memory_space<vmem>>, vector<1x8x32xf32>,
    %c16_i32 = arith.constant 16 : i32
    %c0_i32_195 = arith.constant 0 : i32
    %292 = arith.cmpi eq, %arg1, %c0_i32_195 : i32
    %293 = arith.extui %292 : i1 to i32
    %c0_i32_196 = arith.constant 0 : i32
    %294 = arith.cmpi ne, %293, %c0_i32_196 : i32
    scf.if %294 {
      %c0_197 = arith.constant 0 : index
      %c0_198 = arith.constant 0 : index
      %c0_199 = arith.constant 0 : index
      %295 = vector.load %arg8[%c0_197, %c0_198, %c0_199] : memref<1x8x32xf32, #tpu.memory_space<vmem>>, vector<1x8x32xf32>
      %296 = vector.shape_cast %295 : vector<1x8x32xf32> to vector<8x32xf32>
      %297 = arith.truncf %296 : vector<8x32xf32> to vector<8x32xbf16>
      %c0_200 = arith.constant 0 : index
      %c0_201 = arith.constant 0 : index
      %298 = vector.load %arg5[%c0_200, %c0_201] : memref<32x64xbf16, #tpu.memory_space<vmem>>, vector<32x64xbf16>
      %cst = arith.constant dense<0.000000e+00> : vector<8x64xf32>
      %299 = tpu.matmul %297, %298, %cst {dimension_numbers = #tpu.dot_dimension_numbers<[1], [0], [0], [1], [0, 0, 1, 1], [], []>} : vector<8x32xbf16>, vector<32x64xbf16>, vector<8x64xf32> -> vector<8x64xf32>
      %c0_202 = arith.constant 0 : index
      %c0_203 = arith.constant 0 : index
      %300 = vector.load %arg6[%c0_202, %c0_203] : memref<1x64xf32, #tpu.memory_space<vmem>>, vector<1x64xf32>
      %301 = vector.broadcast %300 : vector<1x64xf32> to vector<8x64xf32>
      %302 = arith.addf %299, %301 : vector<8x64xf32>
      %303 = vector.extract_strided_slice %302 {offsets = [0, 0], sizes = [8, 32], strides = [1, 1]} : vector<8x64xf32> to vector<8x32xf32>
      %c0_204 = arith.constant 0 : index
      %c0_205 = arith.constant 0 : index
      %c0_206 = arith.constant 0 : index
      %c0_207 = arith.constant 0 : index
      %304 = vector.load %arg7[%c0_204, %c0_205, %c0_206, %c0_207] : memref<2x1x8x32xf32, #tpu.memory_space<vmem>>, vector<1x1x8x32xf32>
      %305 = vector.shape_cast %304 : vector<1x1x8x32xf32> to vector<8x32xf32>
      %306 = vector.shape_cast %303 : vector<8x32xf32> to vector<1x1x8x32xf32>
      tpu.vector_store %arg7[%c0_204, %c0_205, %c0_206, %c0_207], %306 {strides = array<i32>} : memref<2x1x8x32xf32, #tpu.memory_space<vmem>>, vector<1x1x8x32xf32>,
      %307 = vector.extract_strided_slice %302 {offsets = [0, 32], sizes = [8, 32], strides = [1, 1]} : vector<8x64xf32> to vector<8x32xf32>
      %c1 = arith.constant 1 : index
      %c0_208 = arith.constant 0 : index
      %c0_209 = arith.constant 0 : index
      %c0_210 = arith.constant 0 : index
      %308 = vector.load %arg7[%c1, %c0_208, %c0_209, %c0_210] : memref<2x1x8x32xf32, #tpu.memory_space<vmem>>, vector<1x1x8x32xf32>
      %309 = vector.shape_cast %308 : vector<1x1x8x32xf32> to vector<8x32xf32>
      %310 = vector.shape_cast %307 : vector<8x32xf32> to vector<1x1x8x32xf32>
      tpu.vector_store %arg7[%c1, %c0_208, %c0_209, %c0_210], %310 {strides = array<i32>} : memref<2x1x8x32xf32, #tpu.memory_space<vmem>>, vector<1x1x8x32xf32>,
    } else {
    }
    return
  }
  func.func @transform_0(%arg0: i32, %arg1: i32) -> (i32, i32) {
    %c0_i32 = arith.constant 0 : i32
    %c0_i32_0 = arith.constant 0 : i32
    %c0_i32_1 = arith.constant 0 : i32
    return %c0_i32, %c0_i32_0 : i32, i32
  }
  func.func @transform_1(%arg0: i32, %arg1: i32) -> (i32, i32, i32) {
    %c0_i32 = arith.constant 0 : i32
    %c0_i32_0 = arith.constant 0 : i32
    return %arg0, %arg1, %c0_i32 : i32, i32, i32
  }
  func.func @transform_2(%arg0: i32, %arg1: i32) -> (i32, i32, i32, i32) {
    %c0_i32 = arith.constant 0 : i32
    %c0_i32_0 = arith.constant 0 : i32
    %c0_i32_1 = arith.constant 0 : i32
    return %arg0, %arg1, %c0_i32, %c0_i32_0 : i32, i32, i32, i32
  }
  func.func @transform_3(%arg0: i32, %arg1: i32) -> (i32, i32) {
    %c0_i32 = arith.constant 0 : i32
    %c0_i32_0 = arith.constant 0 : i32
    %c0_i32_1 = arith.constant 0 : i32
    return %c0_i32, %c0_i32_0 : i32, i32
  }
  func.func @transform_4(%arg0: i32, %arg1: i32) -> (i32, i32) {
    %c0_i32 = arith.constant 0 : i32
    %c0_i32_0 = arith.constant 0 : i32
    %c0_i32_1 = arith.constant 0 : i32
    return %c0_i32, %c0_i32_0 : i32, i32
  }
  func.func @transform_5(%arg0: i32, %arg1: i32) -> (i32, i32, i32, i32) {
    %c0_i32 = arith.constant 0 : i32
    %c0_i32_0 = arith.constant 0 : i32
    %c0_i32_1 = arith.constant 0 : i32
    %c0_i32_2 = arith.constant 0 : i32
    return %c0_i32, %arg0, %c0_i32_0, %c0_i32_1 : i32, i32, i32, i32
  }
}

</mosaic_0001>

<llo_original>
// kernel: tpu_custom_call.1
$region0: #{tpu_custom_call.1}
  #allocation0 [shape = 'u32[]', space=smem, size = 0x4, offset = 0x4, fixed_abs, tag = 'smem constant byte address 0x4 - core index']
  #allocation1 [shape = 'u32[72,128]{1,0:T(1,128)}', space=vmem, size = 0x9000, scoped, tag = 'internal scratch']
  #allocation2 [shape = 'f32[1,8,32]{2,1,0:T(8,128)}', space=vmem, size = 0x1000, scoped, tag = 'scratch operand']
  #allocation3 [shape = 'f32[1,1]{1,0:T(1,128)S(6)}', space=smem, size = 0x200, scoped, tag = 'scoped memory for tpu_custom_call.1']
  %s0 = inlined_call_operand.<no memory space> [shape: f32[1,1], index: 0, kind: input, shape index: {}]
  %s1 = inlined_call_operand.vmem [shape: s32[2,16,8], index: 1, kind: input, shape index: {}]
  %s2 = inlined_call_operand.vmem [shape: f32[2,16,1,32], index: 2, kind: input, shape index: {}]
  %s3 = inlined_call_operand.vmem [shape: bf16[32,64], index: 3, kind: input, shape index: {}]
  %s4 = inlined_call_operand.vmem [shape: f32[1,64], index: 4, kind: input, shape index: {}]
  %s5 = inlined_call_operand.hbm [shape: f32[2,2,8,32], index: 5, kind: output, shape index: {}]
  %s6 = sld [smem:[#allocation0]]
  $region61: #{tpu_custom_call.1} parent=0
    _
  %s8 = ssub.s32 1, %s6
  %s9 = scalar_select 0, %s8, %s6
  %10 = sst [smem:[#allocation3]] %s0
  $region1: #{tpu_custom_call.1} parent=0
    #allocation4 [shape = 'u8[16384]{0}', space=vmem, size = 0x4000, scoped, tag = 'output window, operand 0']
    #allocation5 [shape = 's32[2]{0}', space=sflag, size = 0x8, scoped, tag = 'scoped memory for tpu_custom_call.1']
    %11 = vsyncpa [#allocation5], 0
    %s12 = scalar_lea.sflag [#allocation5], 1
    %13 = vsyncpa %s12, 0
    loop: start=0, step=1, limit=4
    $region2: #{tpu_custom_call.1} parent=1 // loop_pre_header
      _
    $region3: #{tpu_custom_call.1} parent=1 // loop_header
      %s15 = sphi 0, %s19
      %p16 = scmp.ge.s32.totalorder %s15, 4
      %s22 = sphi 0, %s34
      %s23 = sphi 0, %s30
      %s24 = sphi 0, %s22
      %s25 = sphi 0, %s23
      %s26 = sphi 0, %s24
      %s27 = sphi 0, %s25
      %s35 = sphi 0, %s35
      %s37 = sphi 0, %s35
      %s38 = sphi 0, %s37
      %s52 = sphi 0, %s38
      %s60 = sphi 0, %s62
      %s63 = sphi 0, %s60
      %s64 = sphi 0, %s63
      %s80 = sphi 0, %s64
      %s88 = sphi 0, %s90
      %s91 = sphi 0, %s88
      %s92 = sphi 0, %s91
      %s108 = sphi 0, %s92
      %s112 = sphi 0, %s112
      %s114 = sphi 0, %s112
      %s115 = sphi 0, %s114
      %s129 = sphi 0, %s115
      %s133 = sphi 0, %s133
      %s135 = sphi 0, %s133
      %s136 = sphi 0, %s135
      %s150 = sphi 0, %s136
      %s156 = sphi 0, %s158
      %s159 = sphi 0, %s156
      %s160 = sphi 0, %s159
      %s176 = sphi 0, %s160
    $region4: #{tpu_custom_call.1} parent=1 // loop_header_branch
      %18 = sbr.rel (%p16) target = $region8
    $region5: #{tpu_custom_call.1} parent=1 // loop_body
      %s20 = ssub.s32 %s15, 1
      %s21 = ssub.s32 %s15, 2
      %s28 = sadd.s32 1, %s23
      %p29 = scmp.ge.s32.totalorder %s28, 1
      %s30 = scalar_select %p29, 0, %s28
      %s31 = sadd.s32 1, %s22
      %s32 = scalar_select %p29, %s31, %s22
      %p33 = scmp.ge.s32.totalorder %s32, 2
      %s34 = scalar_select %p33, 0, %s32
      %s36 = sadd.s32 %s35, 1
      %p39 = scmp.eq.s32.totalorder %s15, 1
      %p40 = scmp.ne.s32.totalorder %s35, %s37
      %p41 = scmp.eq.s32.totalorder %s15, 0
      %p42 = por %p40, %p41
      %p43 = scmp.ne.s32.totalorder %s35, %s37
      %p44 = scmp.eq.s32.totalorder %s20, 1
      %p45 = por %p43, %p44
      %p46 = scmp.ne.s32.totalorder %s37, %s38
      %p47 = scmp.eq.s32.totalorder %s20, 0
      %p48 = por %p46, %p47
      %p49 = scmp.ne.s32.totalorder %s37, %s38
      %p50 = scmp.eq.s32.totalorder %s21, 1
      %p51 = por %p49, %p50
      %p53 = scmp.ne.s32.totalorder %s38, %s52
      %p54 = scmp.eq.s32.totalorder %s21, 0
      %p55 = por %p53, %p54
      %s56 = ssub.s32 %s22, %s34
      %s57 = ssub.s32 %s23, %s30
      %s58 = sor.u32 %s56, %s57
      %p59 = scmp.eq.s32.totalorder %s58, 0
      %s61 = sadd.s32 %s60, 1
      %s62 = scalar_select %p59, %s60, %s61
      %p65 = pneg %p59
      %p66 = scmp.eq.s32.totalorder %s15, 1
      %p67 = por %p65, %p66
      %p68 = scmp.ne.s32.totalorder %s60, %s63
      %p69 = scmp.eq.s32.totalorder %s15, 0
      %p70 = por %p68, %p69
      %p71 = scmp.ne.s32.totalorder %s60, %s63
      %p72 = scmp.eq.s32.totalorder %s20, 1
      %p73 = por %p71, %p72
      %p74 = scmp.ne.s32.totalorder %s63, %s64
      %p75 = scmp.eq.s32.totalorder %s20, 0
      %p76 = por %p74, %p75
      %p77 = scmp.ne.s32.totalorder %s63, %s64
      %p78 = scmp.eq.s32.totalorder %s21, 1
      %p79 = por %p77, %p78
      %p81 = scmp.ne.s32.totalorder %s64, %s80
      %p82 = scmp.eq.s32.totalorder %s21, 0
      %p83 = por %p81, %p82
      %s84 = ssub.s32 %s22, %s34
      %s85 = ssub.s32 %s23, %s30
      %s86 = sor.u32 %s84, %s85
      %p87 = scmp.eq.s32.totalorder %s86, 0
      %s89 = sadd.s32 %s88, 1
      %s90 = scalar_select %p87, %s88, %s89
      %p93 = pneg %p87
      %p94 = scmp.eq.s32.totalorder %s15, 1
      %p95 = por %p93, %p94
      %p96 = scmp.ne.s32.totalorder %s88, %s91
      %p97 = scmp.eq.s32.totalorder %s15, 0
      %p98 = por %p96, %p97
      %p99 = scmp.ne.s32.totalorder %s88, %s91
      %p100 = scmp.eq.s32.totalorder %s20, 1
      %p101 = por %p99, %p100
      %p102 = scmp.ne.s32.totalorder %s91, %s92
      %p103 = scmp.eq.s32.totalorder %s20, 0
      %p104 = por %p102, %p103
      %p105 = scmp.ne.s32.totalorder %s91, %s92
      %p106 = scmp.eq.s32.totalorder %s21, 1
      %p107 = por %p105, %p106
      %p109 = scmp.ne.s32.totalorder %s92, %s108
      %p110 = scmp.eq.s32.totalorder %s21, 0
      %p111 = por %p109, %p110
      %s113 = sadd.s32 %s112, 1
      %p116 = scmp.eq.s32.totalorder %s15, 1
      %p117 = scmp.ne.s32.totalorder %s112, %s114
      %p118 = scmp.eq.s32.totalorder %s15, 0
      %p119 = por %p117, %p118
      %p120 = scmp.ne.s32.totalorder %s112, %s114
      %p121 = scmp.eq.s32.totalorder %s20, 1
      %p122 = por %p120, %p121
      %p123 = scmp.ne.s32.totalorder %s114, %s115
      %p124 = scmp.eq.s32.totalorder %s20, 0
      %p125 = por %p123, %p124
      %p126 = scmp.ne.s32.totalorder %s114, %s115
      %p127 = scmp.eq.s32.totalorder %s21, 1
      %p128 = por %p126, %p127
      %p130 = scmp.ne.s32.totalorder %s115, %s129
      %p131 = scmp.eq.s32.totalorder %s21, 0
      %p132 = por %p130, %p131
      %s134 = sadd.s32 %s133, 1
      %p137 = scmp.eq.s32.totalorder %s15, 1
      %p138 = scmp.ne.s32.totalorder %s133, %s135
      %p139 = scmp.eq.s32.totalorder %s15, 0
      %p140 = por %p138, %p139
      %p141 = scmp.ne.s32.totalorder %s133, %s135
      %p142 = scmp.eq.s32.totalorder %s20, 1
      %p143 = por %p141, %p142
      %p144 = scmp.ne.s32.totalorder %s135, %s136
      %p145 = scmp.eq.s32.totalorder %s20, 0
      %p146 = por %p144, %p145
      %p147 = scmp.ne.s32.totalorder %s135, %s136
      %p148 = scmp.eq.s32.totalorder %s21, 1
      %p149 = por %p147, %p148
      %p151 = scmp.ne.s32.totalorder %s136, %s150
      %p152 = scmp.eq.s32.totalorder %s21, 0
      %p153 = por %p151, %p152
      %s154 = ssub.s32 %s22, %s34
      %p155 = scmp.eq.s32.totalorder %s154, 0
      %s157 = sadd.s32 %s156, 1
      %s158 = scalar_select %p155, %s156, %s157
      %p161 = pneg %p155
      %p162 = scmp.eq.s32.totalorder %s15, 1
      %p163 = por %p161, %p162
      %p164 = scmp.ne.s32.totalorder %s156, %s159
      %p165 = scmp.eq.s32.totalorder %s15, 0
      %p166 = por %p164, %p165
      %p167 = scmp.ne.s32.totalorder %s156, %s159
      %p168 = scmp.eq.s32.totalorder %s20, 1
      %p169 = por %p167, %p168
      %p170 = scmp.ne.s32.totalorder %s159, %s160
      %p171 = scmp.eq.s32.totalorder %s20, 0
      %p172 = por %p170, %p171
      %p173 = scmp.ne.s32.totalorder %s159, %s160
      %p174 = scmp.eq.s32.totalorder %s21, 1
      %p175 = por %p173, %p174
      %p177 = scmp.ne.s32.totalorder %s160, %s176
      %p178 = scmp.eq.s32.totalorder %s21, 0
      %p179 = por %p177, %p178
      %p180 = scmp.le.s32.totalorder 1, %s15
      %p181 = scmp.lt.s32.totalorder %s15, 3
      %p182 = pnand %p180, %p181
      %p183 = pneg %p182
      // Predicated region
      $region9: #{tpu_custom_call.1} parent=5 // pred_check
        _
      $region10: #{tpu_custom_call.1} parent=5 // pred_check_branch
        %185 = sbr.rel (%p182) target = $region12
      $region11: #{tpu_custom_call.1} parent=5 // pred_region
        %s186 = ssub.s32 %s15, 1
        // Predicated region
        $region13: #{tpu_custom_call.1} parent=11 // pred_check
          %p187 = pneg %p48
        $region14: #{tpu_custom_call.1} parent=11 // pred_check_branch
          %189 = sbr.rel (%p187) target = $region16
        $region15: #{tpu_custom_call.1} parent=11 // pred_region
          _
        $region16: #{tpu_custom_call.1} parent=11 // pred_fallthru
          _
        // Predicated region
        $region17: #{tpu_custom_call.1} parent=11 // pred_check
          %p190 = pneg %p125
        $region18: #{tpu_custom_call.1} parent=11 // pred_check_branch
          %192 = sbr.rel (%p190) target = $region20
        $region19: #{tpu_custom_call.1} parent=11 // pred_region
          _
        $region20: #{tpu_custom_call.1} parent=11 // pred_fallthru
          _
        // Predicated region
        $region21: #{tpu_custom_call.1} parent=11 // pred_check
          %p193 = pneg %p146
        $region22: #{tpu_custom_call.1} parent=11 // pred_check_branch
          %195 = sbr.rel (%p193) target = $region24
        $region23: #{tpu_custom_call.1} parent=11 // pred_region
          _
        $region24: #{tpu_custom_call.1} parent=11 // pred_fallthru
          _
      $region12: #{tpu_custom_call.1} parent=5 // pred_fallthru
        _
      %p196 = scmp.lt.s32.totalorder %s15, 2
      // Predicated region
      $region25: #{tpu_custom_call.1} parent=5 // pred_check
        %p197 = pneg %p196
      $region26: #{tpu_custom_call.1} parent=5 // pred_check_branch
        %199 = sbr.rel (%p197) target = $region28
      $region27: #{tpu_custom_call.1} parent=5 // pred_region
        // Predicated region
        $region29: #{tpu_custom_call.1} parent=27 // pred_check
          %p200 = pneg %p70
        $region30: #{tpu_custom_call.1} parent=27 // pred_check_branch
          %202 = sbr.rel (%p200) target = $region32
        $region31: #{tpu_custom_call.1} parent=27 // pred_region
          %s203 = smul.u32 2, %s23
          %p204 = scmp.lt.s32.totalorder %s22, 1
          %s205 = scalar_select %p204, %s22, 1
          %p206 = scmp.lt.s32.totalorder %s203, 1
          %s207 = scalar_select %p206, %s203, 1
          %s208 = smul.addr %s205, 2
          %s209 = sadd.s32 %s207, %s208
          %s210 = smul.addr %s209, 8
          %s211 = scalar_lea.vmem %s1, %s210
          %s212 = smul.u32 2, %s23
        $region32: #{tpu_custom_call.1} parent=27 // pred_fallthru
          _
        // Predicated region
        $region33: #{tpu_custom_call.1} parent=27 // pred_check
          %p213 = pneg %p98
        $region34: #{tpu_custom_call.1} parent=27 // pred_check_branch
          %215 = sbr.rel (%p213) target = $region36
        $region35: #{tpu_custom_call.1} parent=27 // pred_region
          %s216 = smul.u32 16, %s23
          %p217 = scmp.lt.s32.totalorder %s22, 1
          %s218 = scalar_select %p217, %s22, 1
          %p219 = scmp.lt.s32.totalorder %s216, 15
          %s220 = scalar_select %p219, %s216, 15
          %s221 = smul.addr %s218, 16
          %s222 = sadd.s32 %s220, %s221
          %s223 = scalar_lea.vmem %s2, %s222
          %s224 = smul.u32 16, %s23
        $region36: #{tpu_custom_call.1} parent=27 // pred_fallthru
          _
      $region28: #{tpu_custom_call.1} parent=5 // pred_fallthru
        _
      %p225 = scmp.le.s32.totalorder 1, %s15
      %p226 = scmp.lt.s32.totalorder %s15, 3
      %p227 = pnand %p225, %p226
      %p228 = pneg %p227
      // Predicated region
      $region37: #{tpu_custom_call.1} parent=5 // pred_check
        _
      $region38: #{tpu_custom_call.1} parent=5 // pred_check_branch
        %230 = sbr.rel (%p227) target = $region40
      $region39: #{tpu_custom_call.1} parent=5 // pred_region
        %s231 = ssub.s32 %s15, 1
        %p232 = pneg %p48
        %p233 = pneg %p45
        %s234 = smul.u32 2, %s25
        %p235 = scmp.lt.s32.totalorder %s24, 1
        %s236 = scalar_select %p235, %s24, 1
        %p237 = scmp.lt.s32.totalorder %s234, 1
        %s238 = scalar_select %p237, %s234, 1
        %s239 = smul.addr %s236, 2
        %s240 = sadd.s32 %s238, %s239
        %s241 = smul.addr %s240, 8
        %s242 = scalar_lea.vmem %s1, %s241
        %p243 = pneg %p76
        %p244 = pneg %p73
        %s245 = smul.u32 16, %s25
        %p246 = scmp.lt.s32.totalorder %s24, 1
        %s247 = scalar_select %p246, %s24, 1
        %p248 = scmp.lt.s32.totalorder %s245, 15
        %s249 = scalar_select %p248, %s245, 15
        %s250 = smul.addr %s247, 16
        %s251 = sadd.s32 %s249, %s250
        %s252 = scalar_lea.vmem %s2, %s251
        %p253 = pneg %p104
        %p254 = pneg %p101
        %p255 = pneg %p125
        %p256 = pneg %p122
        %p257 = pneg %p146
        %p258 = pneg %p143
        %p259 = pneg %p172
        %p260 = pneg %p169
        %s261 = sand.u32 %s159, 1
        %s262 = scalar_lea.sflag [#allocation5], %s261
        %s263 = sand.u32 %s159, 1
        %s264 = smul.addr %s263, 16
        %s265 = scalar_lea.vmem [#allocation4], %s264
        %s266 = smul.u32 2, %s25
        %p267 = scmp.lt.s32.totalorder %s24, 1
        %s268 = scalar_select %p267, %s24, 1
        %p269 = scmp.lt.s32.totalorder %s266, 1
        %s270 = scalar_select %p269, %s266, 1
        %s271 = smul.addr %s268, 2
        %s272 = sadd.s32 %s270, %s271
        %s273 = smul.addr %s272, 8
        %s274 = scalar_lea.vmem %s1, %s273
        %s275 = smul.u32 2, %s25
        %s276 = smul.u32 16, %s25
        %p277 = scmp.lt.s32.totalorder %s24, 1
        %s278 = scalar_select %p277, %s24, 1
        %p279 = scmp.lt.s32.totalorder %s276, 15
        %s280 = scalar_select %p279, %s276, 15
        %s281 = smul.addr %s278, 16
        %s282 = sadd.s32 %s280, %s281
        %s283 = scalar_lea.vmem %s2, %s282
        %s284 = smul.u32 16, %s25
        %s286 = sld [smem:[#allocation3]]
        %p287 = scmp.eq.s32.totalorder %s25, 0
        // Predicated region
        $region41: #{tpu_custom_call.1} parent=39 // pred_check
          %p288 = pneg %p287
        $region42: #{tpu_custom_call.1} parent=39 // pred_check_branch
          %290 = sbr.rel (%p288) target = $region44
        $region43: #{tpu_custom_call.1} parent=39 // pred_region
          %v291 = vstv %s286
          %vm292 = vcmask 261120
          %293 = vst.msk [vmem:[#allocation2] sm:$0xff] %vm292, %v291
        $region44: #{tpu_custom_call.1} parent=39 // pred_fallthru
          _
        %v294 = vld [vmem:[%s274] sm:$0x1]
        %v295 = vld [vmem:[%s283] sm:$0x1]
        %v296 = vperm.slane %v294, 0
        %v297 = vlaneseq
        %v298 = vshrl.u32 %v297, 7
        %300 = vset.pattern.permute.xlu0 %v298
        %301 = vperm.xlu0 %300, %v296
        %v302 = vpop.permute.xlu0 %301
        %vm303 = vcmp.ne.s32.totalorder %v302, 0
        %v304 = vsel %vm303, 1, 0
        %vm305 = vcmp.eq.s32.totalorder %v304, 1
        %v307 = vperm.slane %v295, 0
        %v309 = vstv %s286
        %v310 = vsel %vm305, %v307, %v309
        %v311 = vld [vmem:[#allocation2] sm:$0xff]
        %v312 = vmax.f32 %v311, %v310
        %vm313 = vcmask 261120
        %314 = vst.msk [vmem:[#allocation2] sm:$0xff] %vm313, %v312
        %v315 = vld [vmem:[%s274 + $0x1] sm:$0x1]
        %s316 = scalar_lea.vmem %s283, 1
        %v317 = vld [vmem:[%s316] sm:$0x1]
        %v318 = vperm.slane %v315, 0
        %v319 = vlaneseq
        %v320 = vshrl.u32 %v319, 7
        %322 = vset.pattern.permute.xlu0 %v320
        %323 = vperm.xlu0 %322, %v318
        %v324 = vpop.permute.xlu0 %323
        %vm325 = vcmp.ne.s32.totalorder %v324, 0
        %v326 = vsel %vm325, 1, 0
        %vm327 = vcmp.eq.s32.totalorder %v326, 1
        %v329 = vperm.slane %v317, 0
        %v331 = vsel %vm327, %v329, %v309
        %v332 = vld [vmem:[#allocation2] sm:$0xff]
        %v333 = vmax.f32 %v332, %v331
        %334 = vst.msk [vmem:[#allocation2] sm:$0xff] %vm313, %v333
        %v335 = vld [vmem:[%s274 + $0x2] sm:$0x1]
        %s336 = scalar_lea.vmem %s283, 2
        %v337 = vld [vmem:[%s336] sm:$0x1]
        %v338 = vperm.slane %v335, 0
        %v339 = vlaneseq
        %v340 = vshrl.u32 %v339, 7
        %342 = vset.pattern.permute.xlu0 %v340
        %343 = vperm.xlu0 %342, %v338
        %v344 = vpop.permute.xlu0 %343
        %vm345 = vcmp.ne.s32.totalorder %v344, 0
        %v346 = vsel %vm345, 1, 0
        %vm347 = vcmp.eq.s32.totalorder %v346, 1
        %v349 = vperm.slane %v337, 0
        %v351 = vsel %vm347, %v349, %v309
        %v352 = vld [vmem:[#allocation2] sm:$0xff]
        %v353 = vmax.f32 %v352, %v351
        %354 = vst.msk [vmem:[#allocation2] sm:$0xff] %vm313, %v353
        %v355 = vld [vmem:[%s274 + $0x3] sm:$0x1]
        %s356 = scalar_lea.vmem %s283, 3
        %v357 = vld [vmem:[%s356] sm:$0x1]
        %v358 = vperm.slane %v355, 0
        %v359 = vlaneseq
        %v360 = vshrl.u32 %v359, 7
        %362 = vset.pattern.permute.xlu0 %v360
        %363 = vperm.xlu0 %362, %v358
        %v364 = vpop.permute.xlu0 %363
        %vm365 = vcmp.ne.s32.totalorder %v364, 0
        %v366 = vsel %vm365, 1, 0
        %vm367 = vcmp.eq.s32.totalorder %v366, 1
        %v369 = vperm.slane %v357, 0
        %v371 = vsel %vm367, %v369, %v309
        %v372 = vld [vmem:[#allocation2] sm:$0xff]
        %v373 = vmax.f32 %v372, %v371
        %374 = vst.msk [vmem:[#allocation2] sm:$0xff] %vm313, %v373
        %v375 = vld [vmem:[%s274 + $0x4] sm:$0x1]
        %s376 = scalar_lea.vmem %s283, 4
        %v377 = vld [vmem:[%s376] sm:$0x1]
        %v378 = vperm.slane %v375, 0
        %v379 = vlaneseq
        %v380 = vshrl.u32 %v379, 7
        %382 = vset.pattern.permute.xlu0 %v380
        %383 = vperm.xlu0 %382, %v378
        %v384 = vpop.permute.xlu0 %383
        %vm385 = vcmp.ne.s32.totalorder %v384, 0
        %v386 = vsel %vm385, 1, 0
        %vm387 = vcmp.eq.s32.totalorder %v386, 1
        %v389 = vperm.slane %v377, 0
        %v391 = vsel %vm387, %v389, %v309
        %v392 = vld [vmem:[#allocation2] sm:$0xff]
        %v393 = vmax.f32 %v392, %v391
        %394 = vst.msk [vmem:[#allocation2] sm:$0xff] %vm313, %v393
        %v395 = vld [vmem:[%s274 + $0x5] sm:$0x1]
        %s396 = scalar_lea.vmem %s283, 5
        %v397 = vld [vmem:[%s396] sm:$0x1]
        %v398 = vperm.slane %v395, 0
        %v399 = vlaneseq
        %v400 = vshrl.u32 %v399, 7
        %402 = vset.pattern.permute.xlu0 %v400
        %403 = vperm.xlu0 %402, %v398
        %v404 = vpop.permute.xlu0 %403
        %vm405 = vcmp.ne.s32.totalorder %v404, 0
        %v406 = vsel %vm405, 1, 0
        %vm407 = vcmp.eq.s32.totalorder %v406, 1
        %v409 = vperm.slane %v397, 0
        %v411 = vsel %vm407, %v409, %v309
        %v412 = vld [vmem:[#allocation2] sm:$0xff]
        %v413 = vmax.f32 %v412, %v411
        %414 = vst.msk [vmem:[#allocation2] sm:$0xff] %vm313, %v413
        %v415 = vld [vmem:[%s274 + $0x6] sm:$0x1]
        %s416 = scalar_lea.vmem %s283, 6
        %v417 = vld [vmem:[%s416] sm:$0x1]
        %v418 = vperm.slane %v415, 0
        %v419 = vlaneseq
        %v420 = vshrl.u32 %v419, 7
        %422 = vset.pattern.permute.xlu0 %v420
        %423 = vperm.xlu0 %422, %v418
        %v424 = vpop.permute.xlu0 %423
        %vm425 = vcmp.ne.s32.totalorder %v424, 0
        %v426 = vsel %vm425, 1, 0
        %vm427 = vcmp.eq.s32.totalorder %v426, 1
        %v429 = vperm.slane %v417, 0
        %v431 = vsel %vm427, %v429, %v309
        %v432 = vld [vmem:[#allocation2] sm:$0xff]
        %v433 = vmax.f32 %v432, %v431
        %434 = vst.msk [vmem:[#allocation2] sm:$0xff] %vm313, %v433
        %v435 = vld [vmem:[%s274 + $0x7] sm:$0x1]
        %s436 = scalar_lea.vmem %s283, 7
        %v437 = vld [vmem:[%s436] sm:$0x1]
        %v438 = vperm.slane %v435, 0
        %v439 = vlaneseq
        %v440 = vshrl.u32 %v439, 7
        %442 = vset.pattern.permute.xlu0 %v440
        %443 = vperm.xlu0 %442, %v438
        %v444 = vpop.permute.xlu0 %443
        %vm445 = vcmp.ne.s32.totalorder %v444, 0
        %v446 = vsel %vm445, 1, 0
        %vm447 = vcmp.eq.s32.totalorder %v446, 1
        %v449 = vperm.slane %v437, 0
        %v451 = vsel %vm447, %v449, %v309
        %v452 = vld [vmem:[#allocation2] sm:$0xff]
        %v453 = vmax.f32 %v452, %v451
        %454 = vst.msk [vmem:[#allocation2] sm:$0xff] %vm313, %v453
        %v455 = vld [vmem:[%s274 + $0x8] sm:$0x1]
        %s456 = scalar_lea.vmem %s283, 8
        %v457 = vld [vmem:[%s456] sm:$0x1]
        %v458 = vperm.slane %v455, 0
        %v459 = vlaneseq
        %v460 = vshrl.u32 %v459, 7
        %462 = vset.pattern.permute.xlu0 %v460
        %463 = vperm.xlu0 %462, %v458
        %v464 = vpop.permute.xlu0 %463
        %vm465 = vcmp.ne.s32.totalorder %v464, 0
        %v466 = vsel %vm465, 1, 0
        %vm467 = vcmp.eq.s32.totalorder %v466, 1
        %v469 = vperm.slane %v457, 0
        %v471 = vsel %vm467, %v469, %v309
        %v472 = vld [vmem:[#allocation2] sm:$0xff]
        %v473 = vmax.f32 %v472, %v471
        %474 = vst.msk [vmem:[#allocation2] sm:$0xff] %vm313, %v473
        %v475 = vld [vmem:[%s274 + $0x9] sm:$0x1]
        %s476 = scalar_lea.vmem %s283, 9
        %v477 = vld [vmem:[%s476] sm:$0x1]
        %v478 = vperm.slane %v475, 0
        %v479 = vlaneseq
        %v480 = vshrl.u32 %v479, 7
        %482 = vset.pattern.permute.xlu0 %v480
        %483 = vperm.xlu0 %482, %v478
        %v484 = vpop.permute.xlu0 %483
        %vm485 = vcmp.ne.s32.totalorder %v484, 0
        %v486 = vsel %vm485, 1, 0
        %vm487 = vcmp.eq.s32.totalorder %v486, 1
        %v489 = vperm.slane %v477, 0
        %v491 = vsel %vm487, %v489, %v309
        %v492 = vld [vmem:[#allocation2] sm:$0xff]
        %v493 = vmax.f32 %v492, %v491
        %494 = vst.msk [vmem:[#allocation2] sm:$0xff] %vm313, %v493
        %v495 = vld [vmem:[%s274 + $0xa] sm:$0x1]
        %s496 = scalar_lea.vmem %s283, 10
        %v497 = vld [vmem:[%s496] sm:$0x1]
        %v498 = vperm.slane %v495, 0
        %v499 = vlaneseq
        %v500 = vshrl.u32 %v499, 7
        %502 = vset.pattern.permute.xlu0 %v500
        %503 = vperm.xlu0 %502, %v498
        %v504 = vpop.permute.xlu0 %503
        %vm505 = vcmp.ne.s32.totalorder %v504, 0
        %v506 = vsel %vm505, 1, 0
        %vm507 = vcmp.eq.s32.totalorder %v506, 1
        %v509 = vperm.slane %v497, 0
        %v511 = vsel %vm507, %v509, %v309
        %v512 = vld [vmem:[#allocation2] sm:$0xff]
        %v513 = vmax.f32 %v512, %v511
        %514 = vst.msk [vmem:[#allocation2] sm:$0xff] %vm313, %v513
        %v515 = vld [vmem:[%s274 + $0xb] sm:$0x1]
        %s516 = scalar_lea.vmem %s283, 11
        %v517 = vld [vmem:[%s516] sm:$0x1]
        %v518 = vperm.slane %v515, 0
        %v519 = vlaneseq
        %v520 = vshrl.u32 %v519, 7
        %522 = vset.pattern.permute.xlu0 %v520
        %523 = vperm.xlu0 %522, %v518
        %v524 = vpop.permute.xlu0 %523
        %vm525 = vcmp.ne.s32.totalorder %v524, 0
        %v526 = vsel %vm525, 1, 0
        %vm527 = vcmp.eq.s32.totalorder %v526, 1
        %v529 = vperm.slane %v517, 0
        %v531 = vsel %vm527, %v529, %v309
        %v532 = vld [vmem:[#allocation2] sm:$0xff]
        %v533 = vmax.f32 %v532, %v531
        %534 = vst.msk [vmem:[#allocation2] sm:$0xff] %vm313, %v533
        %v535 = vld [vmem:[%s274 + $0xc] sm:$0x1]
        %s536 = scalar_lea.vmem %s283, 12
        %v537 = vld [vmem:[%s536] sm:$0x1]
        %v538 = vperm.slane %v535, 0
        %v539 = vlaneseq
        %v540 = vshrl.u32 %v539, 7
        %542 = vset.pattern.permute.xlu0 %v540
        %543 = vperm.xlu0 %542, %v538
        %v544 = vpop.permute.xlu0 %543
        %vm545 = vcmp.ne.s32.totalorder %v544, 0
        %v546 = vsel %vm545, 1, 0
        %vm547 = vcmp.eq.s32.totalorder %v546, 1
        %v549 = vperm.slane %v537, 0
        %v551 = vsel %vm547, %v549, %v309
        %v552 = vld [vmem:[#allocation2] sm:$0xff]
        %v553 = vmax.f32 %v552, %v551
        %554 = vst.msk [vmem:[#allocation2] sm:$0xff] %vm313, %v553
        %v555 = vld [vmem:[%s274 + $0xd] sm:$0x1]
        %s556 = scalar_lea.vmem %s283, 13
        %v557 = vld [vmem:[%s556] sm:$0x1]
        %v558 = vperm.slane %v555, 0
        %v559 = vlaneseq
        %v560 = vshrl.u32 %v559, 7
        %562 = vset.pattern.permute.xlu0 %v560
        %563 = vperm.xlu0 %562, %v558
        %v564 = vpop.permute.xlu0 %563
        %vm565 = vcmp.ne.s32.totalorder %v564, 0
        %v566 = vsel %vm565, 1, 0
        %vm567 = vcmp.eq.s32.totalorder %v566, 1
        %v569 = vperm.slane %v557, 0
        %v571 = vsel %vm567, %v569, %v309
        %v572 = vld [vmem:[#allocation2] sm:$0xff]
        %v573 = vmax.f32 %v572, %v571
        %574 = vst.msk [vmem:[#allocation2] sm:$0xff] %vm313, %v573
        %v575 = vld [vmem:[%s274 + $0xe] sm:$0x1]
        %s576 = scalar_lea.vmem %s283, 14
        %v577 = vld [vmem:[%s576] sm:$0x1]
        %v578 = vperm.slane %v575, 0
        %v579 = vlaneseq
        %v580 = vshrl.u32 %v579, 7
        %582 = vset.pattern.permute.xlu0 %v580
        %583 = vperm.xlu0 %582, %v578
        %v584 = vpop.permute.xlu0 %583
        %vm585 = vcmp.ne.s32.totalorder %v584, 0
        %v586 = vsel %vm585, 1, 0
        %vm587 = vcmp.eq.s32.totalorder %v586, 1
        %v589 = vperm.slane %v577, 0
        %v591 = vsel %vm587, %v589, %v309
        %v592 = vld [vmem:[#allocation2] sm:$0xff]
        %v593 = vmax.f32 %v592, %v591
        %594 = vst.msk [vmem:[#allocation2] sm:$0xff] %vm313, %v593
        %v595 = vld [vmem:[%s274 + $0xf] sm:$0x1]
        %s596 = scalar_lea.vmem %s283, 15
        %v597 = vld [vmem:[%s596] sm:$0x1]
        %v598 = vperm.slane %v595, 0
        %v599 = vlaneseq
        %v600 = vshrl.u32 %v599, 7
        %602 = vset.pattern.permute.xlu0 %v600
        %603 = vperm.xlu0 %602, %v598
        %v604 = vpop.permute.xlu0 %603
        %vm605 = vcmp.ne.s32.totalorder %v604, 0
        %v606 = vsel %vm605, 1, 0
        %vm607 = vcmp.eq.s32.totalorder %v606, 1
        %v609 = vperm.slane %v597, 0
        %v611 = vsel %vm607, %v609, %v309
        %v612 = vld [vmem:[#allocation2] sm:$0xff]
        %v613 = vmax.f32 %v612, %v611
        %614 = vst.msk [vmem:[#allocation2] sm:$0xff] %vm313, %v613
        // Predicated region
        $region45: #{tpu_custom_call.1} parent=39 // pred_check
          %p615 = pneg %p287
        $region46: #{tpu_custom_call.1} parent=39 // pred_check_branch
          %617 = sbr.rel (%p615) target = $region48
        $region47: #{tpu_custom_call.1} parent=39 // pred_region
          %v618 = vld [vmem:[#allocation2] sm:$0xff]
          %v619 = vpack.c.bf16 %v618, %v618
          %v620 = vld [vmem:[%s3] sm:$0xf]
          %v621 = vld [vmem:[%s3 + $0x4] sm:$0xf]
          %v622 = vld [vmem:[%s3 + $0x8] sm:$0xf]
          %v623 = vld [vmem:[%s3 + $0xc] sm:$0xf]
          %v624 = vld [vmem:[%s4] sm:$0x1]
          %v626 = vperm.slane %v624, 0
          %v632 = vunpack.c.l.b16 %v620
          %v633 = vunpack.c.l.b16 %v621
          %v634 = vunpack.c.l.b16 %v622
          %v635 = vunpack.c.l.b16 %v623
          %v636 = vpack.c.b16 %v633, %v632
          %v637 = vpack.c.b16 %v635, %v634
          %v641 = vsel %vm313, %v619, 0
          %643 = vmatpush.bf16.msra.mxu0 0
          %644 = vmatpush.bf16.msra.mxu0 0
          %645 = vmatpush.bf16.msra.mxu0 0
          %646 = vmatpush.bf16.msra.mxu0 0
          %647 = vmatpush.bf16.msra.mxu0 0
          %648 = vmatpush.bf16.msra.mxu0 0
          %649 = vmatpush.bf16.msra.mxu0 %v637
          %650 = vmatpush.bf16.msra.mxu0 %v636
          %651 = vmatmul.bf16.gmra.mxu0 %v641
          %v652 = vpop.f32.mrf.mxu0
          %v653 = vadd.f32 %v626, %v652
          %v654 = vpop.f32.mrf.mxu0
          %655 = vdwg.mxu0
          %656 = vst.msk [vmem:[%s265] sm:$0xff] %vm313, %v653
          %658 = vrot.lane.b32.xlu0 %v653, 96
          %v659 = vpop.permute.xlu0 %658
          %s661 = scalar_lea.vmem %s265, 8 [#allocation4]
          %662 = vst.msk [vmem:[%s661] sm:$0xff] %vm313, %v659
        $region48: #{tpu_custom_call.1} parent=39 // pred_fallthru
          _
        %s663 = sand.u32 %s159, 1
        %s664 = scalar_lea.sflag [#allocation5], %s663
        %s665 = sand.u32 %s159, 1
        %s666 = smul.addr %s665, 16
        %s667 = scalar_lea.vmem [#allocation4], %s666
        // Predicated region
        $region49: #{tpu_custom_call.1} parent=39 // pred_check
          %p668 = pneg %p169
        $region50: #{tpu_custom_call.1} parent=39 // pred_check_branch
          %670 = sbr.rel (%p668) target = $region52
        $region51: #{tpu_custom_call.1} parent=39 // pred_region
          %672 = vsyncadd %s664, 0
          %s673 = smul.addr %s24, 8
          %s674 = scalar_lea.hbm %s5, %s673
          %s675 = sshll.u32 %s667, 4
          %s676 = int_to_ptr.vmem [resolvable:$true] %s675
          %s677 = sshll.u32 %s674, 4
          %s678 = int_to_ptr.hbm [resolvable:$true] %s677
          %683 = dma.vmem_to_hbm [thread:$0]  %s676, 256, %s678, %s664, 128, 256, 8
        $region52: #{tpu_custom_call.1} parent=39 // pred_fallthru
          _
      $region40: #{tpu_custom_call.1} parent=5 // pred_fallthru
        _
      %p684 = scmp.le.s32.totalorder 2, %s15
      // Predicated region
      $region53: #{tpu_custom_call.1} parent=5 // pred_check
        %p685 = pneg %p684
      $region54: #{tpu_custom_call.1} parent=5 // pred_check_branch
        %687 = sbr.rel (%p685) target = $region56
      $region55: #{tpu_custom_call.1} parent=5 // pred_region
        %s688 = ssub.s32 %s15, 2
        // Predicated region
        $region57: #{tpu_custom_call.1} parent=55 // pred_check
          %p689 = pneg %p175
        $region58: #{tpu_custom_call.1} parent=55 // pred_check_branch
          %691 = sbr.rel (%p689) target = $region60
        $region59: #{tpu_custom_call.1} parent=55 // pred_region
          %s692 = sand.u32 %s160, 1
          %s693 = scalar_lea.sflag [#allocation5], %s692
          %s694 = sand.u32 %s160, 1
          %s695 = smul.addr %s694, 16
          %s696 = scalar_lea.vmem [#allocation4], %s695
          %698 = dma.done %s693, 256
        $region60: #{tpu_custom_call.1} parent=55 // pred_fallthru
          _
      $region56: #{tpu_custom_call.1} parent=5 // pred_fallthru
        _
    $region6: #{tpu_custom_call.1} parent=1 // loop_footer
      %s19 = sadd.s32 1, %s15
    $region7: #{tpu_custom_call.1} parent=1 // loop_footer_branch
      %14 = sbr.rel target = $region3
    $region8: #{tpu_custom_call.1} parent=1 // loop_exit
      _
    %699 = vsyncpa [#allocation5], 1
    %s700 = scalar_lea.sflag [#allocation5], 1
    %701 = vsyncpa %s700, 1

</llo_original>
